<compile_context>
chip_gen: v6e
topology: v6e:2x2x1
jax: 0.10.0
libtpu: 0.0.40
codegen_flags: <defaults>
</compile_context>

<pallas_src>
from functools import partial

import jax
import jax.numpy as jnp
from jax.experimental import pallas as pl
from jax.experimental.pallas import tpu as pltpu

# ----------------------------- specs (module __init__ args) -----------------------------
SPECS = dict(
    ScaleAug=False, Dataset="synthetic", SdfScaleFactor=1.0,
    SamplesPerScene=8, ImageSize=(16, 16), PoseFeatSize=8,
    PointFeatSize=15,                 # 3 + 6*L  ->  L = 2 NeRF frequencies
    LatentSize=16, ObjectPoseBranch=False, DepthBranch=False, Render=False,
    EncodeStyle="nerf", PixelAlign=False, ObjCornerWeight=0.0,
    NumEpochs=1, Freeze=False,
)

B       = 2                    # batch
CIN     = 3                    # image channels
H = W   = 16                   # spatial (ImageSize)
CAUX    = 32                   # aux (conv) feature channels (synthetic stand-in for 256)
LATENT  = SPECS["LatentSize"]  # sdf latent size
S       = SPECS["SamplesPerScene"]
PFEAT   = SPECS["PointFeatSize"]
NFREQ   = (PFEAT - 3) // 6
HID     = 32                   # decoder hidden width
NCLASS  = 6                    # x_class width
NHEAD   = 1 + 1 + NCLASS       # packed heads: [hand | obj | class]


# -------------------------------- fused model kernel ------------------------------------
def _fused_kernel(x_ref, xyz_ref,
                  wc_ref, bc_ref, ws_ref, bs_ref,
                  w1l_ref, w1x_ref, b1_ref, w2_ref, b2_ref,
                  whd_ref, bhd_ref,
                  out_ref, *, n_freq):
    # ------------------------------- encoder (per batch) --------------------------------
    x = x_ref[0]                                    # (CIN, HW); HW = 256 is lane-dense
    wc = wc_ref[...]                                # (CAUX, CIN) — torch Conv2d 1x1 layout
    # 1x1 conv == channel mix with K=CIN=3: 3 VPU broadcast-FMAs, MXU skipped entirely.
    acc = wc[:, 0:1] * x[0:1, :]                    # (CAUX, HW)
    for c in range(1, x.shape[0]):
        acc = acc + wc[:, c:c + 1] * x[c:c + 1, :]
    aux = jnp.maximum(acc + bc_ref[...], 0.0)       # ReLU; aux_feat stays local (never stored)

    # global average pool -> row vector (1, CAUX); tiny 32-element relayout.
    pooled = jnp.mean(aux, axis=1, keepdims=True).reshape(1, wc.shape[0])

    # sdf latent head. (mano_feat head is dead: mano_decoder is None.)
    sdf = jnp.dot(pooled, ws_ref[...], preferred_element_type=jnp.float32) + bs_ref[...]

    # ------------------------------- decoder (per batch) --------------------------------
    xyz = xyz_ref[...]                              # (S, 3): this scene's query points
    # latent = sdf_feat.repeat_interleave(S, dim=0): all S rows of this batch share sdf, so
    # the repeat is folded into a broadcast of the latent contribution to layer 1.
    h_lat = jnp.dot(sdf, w1l_ref[...], preferred_element_type=jnp.float32)   # (1, HID)
    h = jnp.broadcast_to(h_lat, (xyz.shape[0], h_lat.shape[1]))              # (S, HID)

    # NeRF positional embedding [xyz, sin(2^k xyz), cos(2^k xyz)] followed by
    # cat([latent, emb], 1) @ W1 — the emb part (K=3 per term) is done as VPU
    # broadcast-FMAs; mathematically identical to concat + single matmul.
    w1x = w1x_ref[...]                              # (PFEAT, HID)

    def add_feat3(h, feat3, row0):
        for c in range(3):
            h = h + feat3[:, c:c + 1] * w1x[row0 + c:row0 + c + 1, :]
        return h

    h = add_feat3(h, xyz, 0)
    for k in range(n_freq):
        f = float(2 ** k)
        h = add_feat3(h, jnp.sin(f * xyz), 3 + 6 * k)
        h = add_feat3(h, jnp.cos(f * xyz), 3 + 6 * k + 3)

    h = jnp.maximum(h + b1_ref[...], 0.0)
    h2 = jnp.maximum(jnp.dot(h, w2_ref[...], preferred_element_type=jnp.float32)
                     + b2_ref[...], 0.0)

    # Three heads packed into one (HID, 8) matmul and a single store.
    out_ref[...] = (jnp.dot(h2, whd_ref[...], preferred_element_type=jnp.float32)
                    + bhd_ref[...])


# ------------------------------------- wrapper -------------------------------------------
_PARAM_ORDER = ("enc_wc", "enc_bc", "enc_ws", "enc_bs",
                "w1_lat", "w1_xyz", "b1", "w2", "b2", "w_heads", "b_heads")


def _const_spec(shape):
    zeros = (0,) * len(shape)
    return pl.BlockSpec(shape, lambda i, _z=zeros: _z)   # resident across grid steps


def model_forward(params, x1_nchw, xyz, cond_input=None):
    """Forward pass of ModelOneEncoderOneDecoder (mano_decoder=None configuration)."""
    b, cin, h, w = x1_nchw.shape
    n = xyz.shape[0]
    assert n == b * S
    # NCHW -> (B, CIN, H*W): pure reshape (no XLA transpose); HW stays the lane dimension.
    x = x1_nchw.reshape(b, cin, h * w)

    weights = [params[k] for k in _PARAM_ORDER]
    packed = pl.pallas_call(
        partial(_fused_kernel, n_freq=NFREQ),
        grid=(b,),
        in_specs=[pl.BlockSpec((1, cin, h * w), lambda i: (i, 0, 0)),   # image, per batch
                  pl.BlockSpec((S, 3), lambda i: (i, 0))]               # this batch's S points
                 + [_const_spec(wt.shape) for wt in weights],
        out_specs=pl.BlockSpec((S, NHEAD), lambda i: (i, 0)),
        out_shape=jax.ShapeDtypeStruct((n, NHEAD), jnp.float32),
        compiler_params=pltpu.CompilerParams(
            dimension_semantics=("parallel",)),       # v7x: shard batches across both TCs
    )(x, xyz, *weights)

    mano_results = None      # mano_decoder is None
    obj_results = None       # use_obj_pose is False when mano_decoder is None

    x_hand = packed[:, 0:1]
    x_obj = packed[:, 1:2]
    x_class = packed[:, 2:2 + NCLASS]
    return x_hand, x_obj, x_class, mano_results, obj_results


# -------------------------------- deterministic params -----------------------------------
def init_params(key):
    ks = jax.random.split(key, 12)
    n = lambda k, shape, scale: scale * jax.random.normal(k, shape, jnp.float32)
    wh = n(ks[9], (HID, 1), 0.2)
    wo = n(ks[10], (HID, 1), 0.2)
    wcls = n(ks[11], (HID, NCLASS), 0.2)
    return dict(
        enc_wc=n(ks[0], (CAUX, CIN), 0.2),        # 1x1 conv weight (out_ch, in_ch)
        enc_bc=n(ks[1], (CAUX, 1), 0.1),          # conv bias (column form for lane broadcast)
        enc_ws=n(ks[2], (CAUX, LATENT), 0.2),     # sdf latent head
        enc_bs=n(ks[3], (1, LATENT), 0.1),
        w1_lat=n(ks[4], (LATENT, HID), 0.2),      # decoder layer-1 (latent rows of W1)
        w1_xyz=n(ks[5], (PFEAT, HID), 0.2),       # decoder layer-1 (NeRF-embedding rows of W1)
        b1=n(ks[6], (1, HID), 0.1),
        w2=n(ks[7], (HID, HID), 0.2),
        b2=n(ks[8], (1, HID), 0.1),
        # heads packed column-wise: [hand | obj | class] -> one (HID, 8) matmul in-kernel
        w_heads=jnp.concatenate([wh, wo, wcls], axis=1),
        b_heads=jnp.zeros((1, NHEAD), jnp.float32),
    )


if __name__ == "__main__":
    key = jax.random.PRNGKey(0)
    k_p, k_x, k_xyz = jax.random.split(key, 3)

    params = init_params(k_p)
    x1 = jax.random.normal(k_x, (B, CIN, H, W), jnp.float32)        # PyTorch-style NCHW image
    xyz = 0.5 * jax.random.normal(k_xyz, (B * S, 3), jnp.float32)   # query points (B*S, 3)
    cond_input = {}                                                  # unused in this configuration

    x_hand, x_obj, x_class, mano_results, obj_results = model_forward(params, x1, xyz, cond_input)
    jax.block_until_ready((x_hand, x_obj, x_class))

    assert x_hand.shape == (B * S, 1)
    assert x_obj.shape == (B * S, 1)
    assert x_class.shape == (B * S, NCLASS)
    assert mano_results is None and obj_results is None
    print("KERNEL_OK")
</pallas_src>

<mosaic_0001>
module attributes {stable_mosaic.version = 11 : i64} {
  func.func @_fused_kernel(%arg0: i32, %arg1: memref<1x3x256xf32, #tpu.memory_space<vmem>>, %arg2: memref<8x3xf32, #tpu.memory_space<vmem>>, %arg3: memref<32x3xf32, #tpu.memory_space<vmem>>, %arg4: memref<32x1xf32, #tpu.memory_space<vmem>>, %arg5: memref<32x16xf32, #tpu.memory_space<vmem>>, %arg6: memref<1x16xf32, #tpu.memory_space<vmem>>, %arg7: memref<16x32xf32, #tpu.memory_space<vmem>>, %arg8: memref<15x32xf32, #tpu.memory_space<vmem>>, %arg9: memref<1x32xf32, #tpu.memory_space<vmem>>, %arg10: memref<32x32xf32, #tpu.memory_space<vmem>>, %arg11: memref<1x32xf32, #tpu.memory_space<vmem>>, %arg12: memref<32x8xf32, #tpu.memory_space<vmem>>, %arg13: memref<1x8xf32, #tpu.memory_space<vmem>>, %arg14: memref<8x8xf32, #tpu.memory_space<vmem>>) attributes {dimension_semantics = [#tpu.dimension_semantics<parallel>], iteration_bounds = array<i64: 2>, scalar_prefetch = 0 : i64, scratch_operands = 0 : i64, tpu.core_type = #tpu.core_type<tc>, window_params = [{transform_indices = @transform_0, window_bounds = array<i64: 1, 3, 256>}, {transform_indices = @transform_1, window_bounds = array<i64: 8, 3>}, {pipeline_mode = #tpu.pipeline_mode<synchronous>, transform_indices = @transform_2, window_bounds = array<i64: 32, 3>}, {pipeline_mode = #tpu.pipeline_mode<synchronous>, transform_indices = @transform_3, window_bounds = array<i64: 32, 1>}, {pipeline_mode = #tpu.pipeline_mode<synchronous>, transform_indices = @transform_4, window_bounds = array<i64: 32, 16>}, {pipeline_mode = #tpu.pipeline_mode<synchronous>, transform_indices = @transform_5, window_bounds = array<i64: 1, 16>}, {pipeline_mode = #tpu.pipeline_mode<synchronous>, transform_indices = @transform_6, window_bounds = array<i64: 16, 32>}, {pipeline_mode = #tpu.pipeline_mode<synchronous>, transform_indices = @transform_7, window_bounds = array<i64: 15, 32>}, {pipeline_mode = #tpu.pipeline_mode<synchronous>, transform_indices = @transform_8, window_bounds = array<i64: 1, 32>}, {pipeline_mode = #tpu.pipeline_mode<synchronous>, transform_indices = @transform_9, window_bounds = array<i64: 32, 32>}, {pipeline_mode = #tpu.pipeline_mode<synchronous>, transform_indices = @transform_10, window_bounds = array<i64: 1, 32>}, {pipeline_mode = #tpu.pipeline_mode<synchronous>, transform_indices = @transform_11, window_bounds = array<i64: 32, 8>}, {pipeline_mode = #tpu.pipeline_mode<synchronous>, transform_indices = @transform_12, window_bounds = array<i64: 1, 8>}, {transform_indices = @transform_13, window_bounds = array<i64: 8, 8>}]} {
    %c0 = arith.constant 0 : index
    %c0_0 = arith.constant 0 : index
    %c0_1 = arith.constant 0 : index
    %0 = vector.load %arg1[%c0, %c0_0, %c0_1] : memref<1x3x256xf32, #tpu.memory_space<vmem>>, vector<1x3x256xf32>
    %1 = vector.shape_cast %0 : vector<1x3x256xf32> to vector<3x256xf32>
    %c0_2 = arith.constant 0 : index
    %c0_3 = arith.constant 0 : index
    %2 = vector.load %arg3[%c0_2, %c0_3] : memref<32x3xf32, #tpu.memory_space<vmem>>, vector<32x3xf32>
    %3 = vector.extract_strided_slice %2 {offsets = [0, 0], sizes = [32, 1], strides = [1, 1]} : vector<32x3xf32> to vector<32x1xf32>
    %4 = vector.extract_strided_slice %1 {offsets = [0, 0], sizes = [1, 256], strides = [1, 1]} : vector<3x256xf32> to vector<1x256xf32>
    %5 = vector.broadcast %3 : vector<32x1xf32> to vector<32x256xf32>
    %6 = vector.broadcast %4 : vector<1x256xf32> to vector<32x256xf32>
    %7 = arith.mulf %5, %6 : vector<32x256xf32>
    %8 = vector.extract_strided_slice %2 {offsets = [0, 1], sizes = [32, 1], strides = [1, 1]} : vector<32x3xf32> to vector<32x1xf32>
    %9 = vector.extract_strided_slice %1 {offsets = [1, 0], sizes = [1, 256], strides = [1, 1]} : vector<3x256xf32> to vector<1x256xf32>
    %10 = vector.broadcast %8 : vector<32x1xf32> to vector<32x256xf32>
    %11 = vector.broadcast %9 : vector<1x256xf32> to vector<32x256xf32>
    %12 = arith.mulf %10, %11 : vector<32x256xf32>
    %13 = arith.addf %7, %12 : vector<32x256xf32>
    %14 = vector.extract_strided_slice %2 {offsets = [0, 2], sizes = [32, 1], strides = [1, 1]} : vector<32x3xf32> to vector<32x1xf32>
    %15 = vector.extract_strided_slice %1 {offsets = [2, 0], sizes = [1, 256], strides = [1, 1]} : vector<3x256xf32> to vector<1x256xf32>
    %16 = vector.broadcast %14 : vector<32x1xf32> to vector<32x256xf32>
    %17 = vector.broadcast %15 : vector<1x256xf32> to vector<32x256xf32>
    %18 = arith.mulf %16, %17 : vector<32x256xf32>
    %19 = arith.addf %13, %18 : vector<32x256xf32>
    %c0_4 = arith.constant 0 : index
    %c0_5 = arith.constant 0 : index
    %20 = vector.load %arg4[%c0_4, %c0_5] : memref<32x1xf32, #tpu.memory_space<vmem>>, vector<32x1xf32>
    %21 = vector.broadcast %20 : vector<32x1xf32> to vector<32x256xf32>
    %22 = arith.addf %19, %21 : vector<32x256xf32>
    %cst = arith.constant 0.000000e+00 : f32
    %23 = vector.broadcast %cst : f32 to vector<32x256xf32>
    %24 = arith.maximumf %22, %23 : vector<32x256xf32>
    %cst_6 = arith.constant dense<0.000000e+00> : vector<32xf32>
    %25 = vector.multi_reduction <add>, %24, %cst_6 [1] : vector<32x256xf32> to vector<32xf32>
    %26 = vector.shape_cast %25 : vector<32xf32> to vector<32x1xf32>
    %cst_7 = arith.constant 2.560000e+02 : f32
    %27 = vector.broadcast %cst_7 : f32 to vector<32x1xf32>
    %28 = arith.divf %26, %27 : vector<32x1xf32>
    %29 = vector.shape_cast %28 : vector<32x1xf32> to vector<1x32xf32>
    %c0_8 = arith.constant 0 : index
    %c0_9 = arith.constant 0 : index
    %30 = vector.load %arg5[%c0_8, %c0_9] : memref<32x16xf32, #tpu.memory_space<vmem>>, vector<32x16xf32>
    %cst_10 = arith.constant dense<0.000000e+00> : vector<1x16xf32>
    %31 = tpu.matmul %29, %30, %cst_10 {dimension_numbers = #tpu.dot_dimension_numbers<[1], [0], [0], [1], [0, 0, 1, 1], [], []>} : vector<1x32xf32>, vector<32x16xf32>, vector<1x16xf32> -> vector<1x16xf32>
    %c0_11 = arith.constant 0 : index
    %c0_12 = arith.constant 0 : index
    %32 = vector.load %arg6[%c0_11, %c0_12] : memref<1x16xf32, #tpu.memory_space<vmem>>, vector<1x16xf32>
    %33 = arith.addf %31, %32 : vector<1x16xf32>
    %c0_13 = arith.constant 0 : index
    %c0_14 = arith.constant 0 : index
    %34 = vector.load %arg2[%c0_13, %c0_14] : memref<8x3xf32, #tpu.memory_space<vmem>>, vector<8x3xf32>
    %c0_15 = arith.constant 0 : index
    %c0_16 = arith.constant 0 : index
    %35 = vector.load %arg7[%c0_15, %c0_16] : memref<16x32xf32, #tpu.memory_space<vmem>>, vector<16x32xf32>
    %cst_17 = arith.constant dense<0.000000e+00> : vector<1x32xf32>
    %36 = tpu.matmul %33, %35, %cst_17 {dimension_numbers = #tpu.dot_dimension_numbers<[1], [0], [0], [1], [0, 0, 1, 1], [], []>} : vector<1x16xf32>, vector<16x32xf32>, vector<1x32xf32> -> vector<1x32xf32>
    %37 = vector.shape_cast %36 : vector<1x32xf32> to vector<1x32xf32>
    %38 = vector.broadcast %37 : vector<1x32xf32> to vector<8x32xf32>
    %c0_18 = arith.constant 0 : index
    %c0_19 = arith.constant 0 : index
    %39 = vector.load %arg8[%c0_18, %c0_19] : memref<15x32xf32, #tpu.memory_space<vmem>>, vector<15x32xf32>
    %40 = vector.extract_strided_slice %34 {offsets = [0, 0], sizes = [8, 1], strides = [1, 1]} : vector<8x3xf32> to vector<8x1xf32>
    %41 = vector.extract_strided_slice %39 {offsets = [0, 0], sizes = [1, 32], strides = [1, 1]} : vector<15x32xf32> to vector<1x32xf32>
    %42 = vector.broadcast %40 : vector<8x1xf32> to vector<8x32xf32>
    %43 = vector.broadcast %41 : vector<1x32xf32> to vector<8x32xf32>
    %44 = arith.mulf %42, %43 : vector<8x32xf32>
    %45 = arith.addf %38, %44 : vector<8x32xf32>
    %46 = vector.extract_strided_slice %34 {offsets = [0, 1], sizes = [8, 1], strides = [1, 1]} : vector<8x3xf32> to vector<8x1xf32>
    %47 = vector.extract_strided_slice %39 {offsets = [1, 0], sizes = [1, 32], strides = [1, 1]} : vector<15x32xf32> to vector<1x32xf32>
    %48 = vector.broadcast %46 : vector<8x1xf32> to vector<8x32xf32>
    %49 = vector.broadcast %47 : vector<1x32xf32> to vector<8x32xf32>
    %50 = arith.mulf %48, %49 : vector<8x32xf32>
    %51 = arith.addf %45, %50 : vector<8x32xf32>
    %52 = vector.extract_strided_slice %34 {offsets = [0, 2], sizes = [8, 1], strides = [1, 1]} : vector<8x3xf32> to vector<8x1xf32>
    %53 = vector.extract_strided_slice %39 {offsets = [2, 0], sizes = [1, 32], strides = [1, 1]} : vector<15x32xf32> to vector<1x32xf32>
    %54 = vector.broadcast %52 : vector<8x1xf32> to vector<8x32xf32>
    %55 = vector.broadcast %53 : vector<1x32xf32> to vector<8x32xf32>
    %56 = arith.mulf %54, %55 : vector<8x32xf32>
    %57 = arith.addf %51, %56 : vector<8x32xf32>
    %cst_20 = arith.constant 1.000000e+00 : f32
    %58 = vector.broadcast %cst_20 : f32 to vector<8x3xf32>
    %59 = arith.mulf %58, %34 : vector<8x3xf32>
    %60 = math.sin %59 : vector<8x3xf32>
    %61 = vector.extract_strided_slice %60 {offsets = [0, 0], sizes = [8, 1], strides = [1, 1]} : vector<8x3xf32> to vector<8x1xf32>
    %62 = vector.extract_strided_slice %39 {offsets = [3, 0], sizes = [1, 32], strides = [1, 1]} : vector<15x32xf32> to vector<1x32xf32>
    %63 = vector.broadcast %61 : vector<8x1xf32> to vector<8x32xf32>
    %64 = vector.broadcast %62 : vector<1x32xf32> to vector<8x32xf32>
    %65 = arith.mulf %63, %64 : vector<8x32xf32>
    %66 = arith.addf %57, %65 : vector<8x32xf32>
    %67 = vector.extract_strided_slice %60 {offsets = [0, 1], sizes = [8, 1], strides = [1, 1]} : vector<8x3xf32> to vector<8x1xf32>
    %68 = vector.extract_strided_slice %39 {offsets = [4, 0], sizes = [1, 32], strides = [1, 1]} : vector<15x32xf32> to vector<1x32xf32>
    %69 = vector.broadcast %67 : vector<8x1xf32> to vector<8x32xf32>
    %70 = vector.broadcast %68 : vector<1x32xf32> to vector<8x32xf32>
    %71 = arith.mulf %69, %70 : vector<8x32xf32>
    %72 = arith.addf %66, %71 : vector<8x32xf32>
    %73 = vector.extract_strided_slice %60 {offsets = [0, 2], sizes = [8, 1], strides = [1, 1]} : vector<8x3xf32> to vector<8x1xf32>
    %74 = vector.extract_strided_slice %39 {offsets = [5, 0], sizes = [1, 32], strides = [1, 1]} : vector<15x32xf32> to vector<1x32xf32>
    %75 = vector.broadcast %73 : vector<8x1xf32> to vector<8x32xf32>
    %76 = vector.broadcast %74 : vector<1x32xf32> to vector<8x32xf32>
    %77 = arith.mulf %75, %76 : vector<8x32xf32>
    %78 = arith.addf %72, %77 : vector<8x32xf32>
    %cst_21 = arith.constant 1.000000e+00 : f32
    %79 = vector.broadcast %cst_21 : f32 to vector<8x3xf32>
    %80 = arith.mulf %79, %34 : vector<8x3xf32>
    %81 = math.cos %80 : vector<8x3xf32>
    %82 = vector.extract_strided_slice %81 {offsets = [0, 0], sizes = [8, 1], strides = [1, 1]} : vector<8x3xf32> to vector<8x1xf32>
    %83 = vector.extract_strided_slice %39 {offsets = [6, 0], sizes = [1, 32], strides = [1, 1]} : vector<15x32xf32> to vector<1x32xf32>
    %84 = vector.broadcast %82 : vector<8x1xf32> to vector<8x32xf32>
    %85 = vector.broadcast %83 : vector<1x32xf32> to vector<8x32xf32>
    %86 = arith.mulf %84, %85 : vector<8x32xf32>
    %87 = arith.addf %78, %86 : vector<8x32xf32>
    %88 = vector.extract_strided_slice %81 {offsets = [0, 1], sizes = [8, 1], strides = [1, 1]} : vector<8x3xf32> to vector<8x1xf32>
    %89 = vector.extract_strided_slice %39 {offsets = [7, 0], sizes = [1, 32], strides = [1, 1]} : vector<15x32xf32> to vector<1x32xf32>
    %90 = vector.broadcast %88 : vector<8x1xf32> to vector<8x32xf32>
    %91 = vector.broadcast %89 : vector<1x32xf32> to vector<8x32xf32>
    %92 = arith.mulf %90, %91 : vector<8x32xf32>
    %93 = arith.addf %87, %92 : vector<8x32xf32>
    %94 = vector.extract_strided_slice %81 {offsets = [0, 2], sizes = [8, 1], strides = [1, 1]} : vector<8x3xf32> to vector<8x1xf32>
    %95 = vector.extract_strided_slice %39 {offsets = [8, 0], sizes = [1, 32], strides = [1, 1]} : vector<15x32xf32> to vector<1x32xf32>
    %96 = vector.broadcast %94 : vector<8x1xf32> to vector<8x32xf32>
    %97 = vector.broadcast %95 : vector<1x32xf32> to vector<8x32xf32>
    %98 = arith.mulf %96, %97 : vector<8x32xf32>
    %99 = arith.addf %93, %98 : vector<8x32xf32>
    %cst_22 = arith.constant 2.000000e+00 : f32
    %100 = vector.broadcast %cst_22 : f32 to vector<8x3xf32>
    %101 = arith.mulf %100, %34 : vector<8x3xf32>
    %102 = math.sin %101 : vector<8x3xf32>
    %103 = vector.extract_strided_slice %102 {offsets = [0, 0], sizes = [8, 1], strides = [1, 1]} : vector<8x3xf32> to vector<8x1xf32>
    %104 = vector.extract_strided_slice %39 {offsets = [9, 0], sizes = [1, 32], strides = [1, 1]} : vector<15x32xf32> to vector<1x32xf32>
    %105 = vector.broadcast %103 : vector<8x1xf32> to vector<8x32xf32>
    %106 = vector.broadcast %104 : vector<1x32xf32> to vector<8x32xf32>
    %107 = arith.mulf %105, %106 : vector<8x32xf32>
    %108 = arith.addf %99, %107 : vector<8x32xf32>
    %109 = vector.extract_strided_slice %102 {offsets = [0, 1], sizes = [8, 1], strides = [1, 1]} : vector<8x3xf32> to vector<8x1xf32>
    %110 = vector.extract_strided_slice %39 {offsets = [10, 0], sizes = [1, 32], strides = [1, 1]} : vector<15x32xf32> to vector<1x32xf32>
    %111 = vector.broadcast %109 : vector<8x1xf32> to vector<8x32xf32>
    %112 = vector.broadcast %110 : vector<1x32xf32> to vector<8x32xf32>
    %113 = arith.mulf %111, %112 : vector<8x32xf32>
    %114 = arith.addf %108, %113 : vector<8x32xf32>
    %115 = vector.extract_strided_slice %102 {offsets = [0, 2], sizes = [8, 1], strides = [1, 1]} : vector<8x3xf32> to vector<8x1xf32>
    %116 = vector.extract_strided_slice %39 {offsets = [11, 0], sizes = [1, 32], strides = [1, 1]} : vector<15x32xf32> to vector<1x32xf32>
    %117 = vector.broadcast %115 : vector<8x1xf32> to vector<8x32xf32>
    %118 = vector.broadcast %116 : vector<1x32xf32> to vector<8x32xf32>
    %119 = arith.mulf %117, %118 : vector<8x32xf32>
    %120 = arith.addf %114, %119 : vector<8x32xf32>
    %cst_23 = arith.constant 2.000000e+00 : f32
    %121 = vector.broadcast %cst_23 : f32 to vector<8x3xf32>
    %122 = arith.mulf %121, %34 : vector<8x3xf32>
    %123 = math.cos %122 : vector<8x3xf32>
    %124 = vector.extract_strided_slice %123 {offsets = [0, 0], sizes = [8, 1], strides = [1, 1]} : vector<8x3xf32> to vector<8x1xf32>
    %125 = vector.extract_strided_slice %39 {offsets = [12, 0], sizes = [1, 32], strides = [1, 1]} : vector<15x32xf32> to vector<1x32xf32>
    %126 = vector.broadcast %124 : vector<8x1xf32> to vector<8x32xf32>
    %127 = vector.broadcast %125 : vector<1x32xf32> to vector<8x32xf32>
    %128 = arith.mulf %126, %127 : vector<8x32xf32>
    %129 = arith.addf %120, %128 : vector<8x32xf32>
    %130 = vector.extract_strided_slice %123 {offsets = [0, 1], sizes = [8, 1], strides = [1, 1]} : vector<8x3xf32> to vector<8x1xf32>
    %131 = vector.extract_strided_slice %39 {offsets = [13, 0], sizes = [1, 32], strides = [1, 1]} : vector<15x32xf32> to vector<1x32xf32>
    %132 = vector.broadcast %130 : vector<8x1xf32> to vector<8x32xf32>
    %133 = vector.broadcast %131 : vector<1x32xf32> to vector<8x32xf32>
    %134 = arith.mulf %132, %133 : vector<8x32xf32>
    %135 = arith.addf %129, %134 : vector<8x32xf32>
    %136 = vector.extract_strided_slice %123 {offsets = [0, 2], sizes = [8, 1], strides = [1, 1]} : vector<8x3xf32> to vector<8x1xf32>
    %137 = vector.extract_strided_slice %39 {offsets = [14, 0], sizes = [1, 32], strides = [1, 1]} : vector<15x32xf32> to vector<1x32xf32>
    %138 = vector.broadcast %136 : vector<8x1xf32> to vector<8x32xf32>
    %139 = vector.broadcast %137 : vector<1x32xf32> to vector<8x32xf32>
    %140 = arith.mulf %138, %139 : vector<8x32xf32>
    %141 = arith.addf %135, %140 : vector<8x32xf32>
    %c0_24 = arith.constant 0 : index
    %c0_25 = arith.constant 0 : index
    %142 = vector.load %arg9[%c0_24, %c0_25] : memref<1x32xf32, #tpu.memory_space<vmem>>, vector<1x32xf32>
    %143 = vector.broadcast %142 : vector<1x32xf32> to vector<8x32xf32>
    %144 = arith.addf %141, %143 : vector<8x32xf32>
    %cst_26 = arith.constant 0.000000e+00 : f32
    %145 = vector.broadcast %cst_26 : f32 to vector<8x32xf32>
    %146 = arith.maximumf %144, %145 : vector<8x32xf32>
    %c0_27 = arith.constant 0 : index
    %c0_28 = arith.constant 0 : index
    %147 = vector.load %arg10[%c0_27, %c0_28] : memref<32x32xf32, #tpu.memory_space<vmem>>, vector<32x32xf32>
    %cst_29 = arith.constant dense<0.000000e+00> : vector<8x32xf32>
    %148 = tpu.matmul %146, %147, %cst_29 {dimension_numbers = #tpu.dot_dimension_numbers<[1], [0], [0], [1], [0, 0, 1, 1], [], []>} : vector<8x32xf32>, vector<32x32xf32>, vector<8x32xf32> -> vector<8x32xf32>
    %c0_30 = arith.constant 0 : index
    %c0_31 = arith.constant 0 : index
    %149 = vector.load %arg11[%c0_30, %c0_31] : memref<1x32xf32, #tpu.memory_space<vmem>>, vector<1x32xf32>
    %150 = vector.broadcast %149 : vector<1x32xf32> to vector<8x32xf32>
    %151 = arith.addf %148, %150 : vector<8x32xf32>
    %cst_32 = arith.constant 0.000000e+00 : f32
    %152 = vector.broadcast %cst_32 : f32 to vector<8x32xf32>
    %153 = arith.maximumf %151, %152 : vector<8x32xf32>
    %c0_33 = arith.constant 0 : index
    %c0_34 = arith.constant 0 : index
    %154 = vector.load %arg12[%c0_33, %c0_34] : memref<32x8xf32, #tpu.memory_space<vmem>>, vector<32x8xf32>
    %cst_35 = arith.constant dense<0.000000e+00> : vector<8x8xf32>
    %155 = tpu.matmul %153, %154, %cst_35 {dimension_numbers = #tpu.dot_dimension_numbers<[1], [0], [0], [1], [0, 0, 1, 1], [], []>} : vector<8x32xf32>, vector<32x8xf32>, vector<8x8xf32> -> vector<8x8xf32>
    %c0_36 = arith.constant 0 : index
    %c0_37 = arith.constant 0 : index
    %156 = vector.load %arg13[%c0_36, %c0_37] : memref<1x8xf32, #tpu.memory_space<vmem>>, vector<1x8xf32>
    %157 = vector.broadcast %156 : vector<1x8xf32> to vector<8x8xf32>
    %158 = arith.addf %155, %157 : vector<8x8xf32>
    %c0_38 = arith.constant 0 : index
    %c0_39 = arith.constant 0 : index
    %159 = vector.load %arg14[%c0_38, %c0_39] : memref<8x8xf32, #tpu.memory_space<vmem>>, vector<8x8xf32>
    tpu.vector_store %arg14[%c0_38, %c0_39], %158 {strides = array<i32>} : memref<8x8xf32, #tpu.memory_space<vmem>>, vector<8x8xf32>,
    return
  }
  func.func @transform_0(%arg0: i32) -> (i32, i32, i32) {
    %c0_i32 = arith.constant 0 : i32
    %c0_i32_0 = arith.constant 0 : i32
    %c0_i32_1 = arith.constant 0 : i32
    return %arg0, %c0_i32, %c0_i32_0 : i32, i32, i32
  }
  func.func @transform_1(%arg0: i32) -> (i32, i32) {
    %c0_i32 = arith.constant 0 : i32
    %c0_i32_0 = arith.constant 0 : i32
    return %arg0, %c0_i32 : i32, i32
  }
  func.func @transform_2(%arg0: i32) -> (i32, i32) {
    %c0_i32 = arith.constant 0 : i32
    %c0_i32_0 = arith.constant 0 : i32
    %c0_i32_1 = arith.constant 0 : i32
    return %c0_i32, %c0_i32_0 : i32, i32
  }
  func.func @transform_3(%arg0: i32) -> (i32, i32) {
    %c0_i32 = arith.constant 0 : i32
    %c0_i32_0 = arith.constant 0 : i32
    %c0_i32_1 = arith.constant 0 : i32
    return %c0_i32, %c0_i32_0 : i32, i32
  }
  func.func @transform_4(%arg0: i32) -> (i32, i32) {
    %c0_i32 = arith.constant 0 : i32
    %c0_i32_0 = arith.constant 0 : i32
    %c0_i32_1 = arith.constant 0 : i32
    return %c0_i32, %c0_i32_0 : i32, i32
  }
  func.func @transform_5(%arg0: i32) -> (i32, i32) {
    %c0_i32 = arith.constant 0 : i32
    %c0_i32_0 = arith.constant 0 : i32
    %c0_i32_1 = arith.constant 0 : i32
    return %c0_i32, %c0_i32_0 : i32, i32
  }
  func.func @transform_6(%arg0: i32) -> (i32, i32) {
    %c0_i32 = arith.constant 0 : i32
    %c0_i32_0 = arith.constant 0 : i32
    %c0_i32_1 = arith.constant 0 : i32
    return %c0_i32, %c0_i32_0 : i32, i32
  }
  func.func @transform_7(%arg0: i32) -> (i32, i32) {
    %c0_i32 = arith.constant 0 : i32
    %c0_i32_0 = arith.constant 0 : i32
    %c0_i32_1 = arith.constant 0 : i32
    return %c0_i32, %c0_i32_0 : i32, i32
  }
  func.func @transform_8(%arg0: i32) -> (i32, i32) {
    %c0_i32 = arith.constant 0 : i32
    %c0_i32_0 = arith.constant 0 : i32
    %c0_i32_1 = arith.constant 0 : i32
    return %c0_i32, %c0_i32_0 : i32, i32
  }
  func.func @transform_9(%arg0: i32) -> (i32, i32) {
    %c0_i32 = arith.constant 0 : i32
    %c0_i32_0 = arith.constant 0 : i32
    %c0_i32_1 = arith.constant 0 : i32
    return %c0_i32, %c0_i32_0 : i32, i32
  }
  func.func @transform_10(%arg0: i32) -> (i32, i32) {
    %c0_i32 = arith.constant 0 : i32
    %c0_i32_0 = arith.constant 0 : i32
    %c0_i32_1 = arith.constant 0 : i32
    return %c0_i32, %c0_i32_0 : i32, i32
  }
  func.func @transform_11(%arg0: i32) -> (i32, i32) {
    %c0_i32 = arith.constant 0 : i32
    %c0_i32_0 = arith.constant 0 : i32
    %c0_i32_1 = arith.constant 0 : i32
    return %c0_i32, %c0_i32_0 : i32, i32
  }
  func.func @transform_12(%arg0: i32) -> (i32, i32) {
    %c0_i32 = arith.constant 0 : i32
    %c0_i32_0 = arith.constant 0 : i32
    %c0_i32_1 = arith.constant 0 : i32
    return %c0_i32, %c0_i32_0 : i32, i32
  }
  func.func @transform_13(%arg0: i32) -> (i32, i32) {
    %c0_i32 = arith.constant 0 : i32
    %c0_i32_0 = arith.constant 0 : i32
    return %arg0, %c0_i32 : i32, i32
  }
}

</mosaic_0001>

<llo_original>
// kernel: tpu_custom_call.1
$region0: #{tpu_custom_call.1}
  #allocation0 [shape = 'u32[]', space=smem, size = 0x4, offset = 0x4, fixed_abs, tag = 'smem constant byte address 0x4 - core index']
  #allocation1 [shape = 'u32[144,128]{1,0:T(1,128)}', space=vmem, size = 0x12000, scoped, tag = 'internal scratch']
  %s0 = inlined_call_operand.vmem [shape: f32[2,3,256], index: 0, kind: input, shape index: {}]
  %s1 = inlined_call_operand.vmem [shape: f32[16,3], index: 1, kind: input, shape index: {}]
  %s2 = inlined_call_operand.vmem [shape: f32[32,3], index: 2, kind: input, shape index: {}]
  %s3 = inlined_call_operand.vmem [shape: f32[32,1], index: 3, kind: input, shape index: {}]
  %s4 = inlined_call_operand.vmem [shape: f32[32,16], index: 4, kind: input, shape index: {}]
  %s5 = inlined_call_operand.vmem [shape: f32[1,16], index: 5, kind: input, shape index: {}]
  %s6 = inlined_call_operand.vmem [shape: f32[16,32], index: 6, kind: input, shape index: {}]
  %s7 = inlined_call_operand.vmem [shape: f32[15,32], index: 7, kind: input, shape index: {}]
  %s8 = inlined_call_operand.vmem [shape: f32[1,32], index: 8, kind: input, shape index: {}]
  %s9 = inlined_call_operand.vmem [shape: f32[32,32], index: 9, kind: input, shape index: {}]
  %s10 = inlined_call_operand.vmem [shape: f32[1,32], index: 10, kind: input, shape index: {}]
  %s11 = inlined_call_operand.vmem [shape: f32[32,8], index: 11, kind: input, shape index: {}]
  %s12 = inlined_call_operand.vmem [shape: f32[1,8], index: 12, kind: input, shape index: {}]
  %s13 = inlined_call_operand.vmem [shape: f32[16,8], index: 13, kind: output, shape index: {}]
  %s14 = sld [smem:[#allocation0]]
  $region85: #{tpu_custom_call.1} parent=0
    _
  %s16 = ssub.s32 1, %s14
  %s17 = scalar_select 0, %s16, %s14
  loop: start=0, step=1, limit=4
  $region2: #{tpu_custom_call.1} parent=0 // loop_pre_header
    _
  $region3: #{tpu_custom_call.1} parent=0 // loop_header
    %s19 = sphi 0, %s23
    %p20 = scmp.ge.s32.totalorder %s19, 4
    %s29 = sphi 0, %s31
    %s32 = sphi 0, %s29
    %s33 = sphi 0, %s32
    %s49 = sphi 0, %s33
    %s55 = sphi 0, %s57
    %s58 = sphi 0, %s55
    %s59 = sphi 0, %s58
    %s75 = sphi 0, %s59
    %s79 = sphi 0, %s79
    %s81 = sphi 0, %s79
    %s82 = sphi 0, %s81
    %s96 = sphi 0, %s82
    %s100 = sphi 0, %s100
    %s102 = sphi 0, %s100
    %s103 = sphi 0, %s102
    %s117 = sphi 0, %s103
    %s121 = sphi 0, %s121
    %s123 = sphi 0, %s121
    %s124 = sphi 0, %s123
    %s138 = sphi 0, %s124
    %s142 = sphi 0, %s142
    %s144 = sphi 0, %s142
    %s145 = sphi 0, %s144
    %s159 = sphi 0, %s145
    %s163 = sphi 0, %s163
    %s165 = sphi 0, %s163
    %s166 = sphi 0, %s165
    %s180 = sphi 0, %s166
    %s184 = sphi 0, %s184
    %s186 = sphi 0, %s184
    %s187 = sphi 0, %s186
    %s201 = sphi 0, %s187
    %s205 = sphi 0, %s205
    %s207 = sphi 0, %s205
    %s208 = sphi 0, %s207
    %s222 = sphi 0, %s208
    %s226 = sphi 0, %s226
    %s228 = sphi 0, %s226
    %s229 = sphi 0, %s228
    %s243 = sphi 0, %s229
    %s247 = sphi 0, %s247
    %s249 = sphi 0, %s247
    %s250 = sphi 0, %s249
    %s264 = sphi 0, %s250
    %s268 = sphi 0, %s268
    %s270 = sphi 0, %s268
    %s271 = sphi 0, %s270
    %s285 = sphi 0, %s271
    %s289 = sphi 0, %s289
    %s291 = sphi 0, %s289
    %s292 = sphi 0, %s291
    %s306 = sphi 0, %s292
    %s312 = sphi 0, %s314
    %s315 = sphi 0, %s312
    %s316 = sphi 0, %s315
    %s332 = sphi 0, %s316
  $region4: #{tpu_custom_call.1} parent=0 // loop_header_branch
    %22 = sbr.rel (%p20) target = $region8
  $region5: #{tpu_custom_call.1} parent=0 // loop_body
    %s24 = ssub.s32 %s19, 1
    %s25 = ssub.s32 %s19, 2
    %s26 = sadd.s32 %s19, 1
    %s27 = ssub.s32 %s19, %s26
    %p28 = scmp.eq.s32.totalorder %s27, 0
    %s30 = sadd.s32 %s29, 1
    %s31 = scalar_select %p28, %s29, %s30
    %p34 = pneg %p28
    %p35 = scmp.eq.s32.totalorder %s19, 1
    %p36 = por %p34, %p35
    %p37 = scmp.ne.s32.totalorder %s29, %s32
    %p38 = scmp.eq.s32.totalorder %s19, 0
    %p39 = por %p37, %p38
    %p40 = scmp.ne.s32.totalorder %s29, %s32
    %p41 = scmp.eq.s32.totalorder %s24, 1
    %p42 = por %p40, %p41
    %p43 = scmp.ne.s32.totalorder %s32, %s33
    %p44 = scmp.eq.s32.totalorder %s24, 0
    %p45 = por %p43, %p44
    %p46 = scmp.ne.s32.totalorder %s32, %s33
    %p47 = scmp.eq.s32.totalorder %s25, 1
    %p48 = por %p46, %p47
    %p50 = scmp.ne.s32.totalorder %s33, %s49
    %p51 = scmp.eq.s32.totalorder %s25, 0
    %p52 = por %p50, %p51
    %s53 = ssub.s32 %s19, %s26
    %p54 = scmp.eq.s32.totalorder %s53, 0
    %s56 = sadd.s32 %s55, 1
    %s57 = scalar_select %p54, %s55, %s56
    %p60 = pneg %p54
    %p61 = scmp.eq.s32.totalorder %s19, 1
    %p62 = por %p60, %p61
    %p63 = scmp.ne.s32.totalorder %s55, %s58
    %p64 = scmp.eq.s32.totalorder %s19, 0
    %p65 = por %p63, %p64
    %p66 = scmp.ne.s32.totalorder %s55, %s58
    %p67 = scmp.eq.s32.totalorder %s24, 1
    %p68 = por %p66, %p67
    %p69 = scmp.ne.s32.totalorder %s58, %s59
    %p70 = scmp.eq.s32.totalorder %s24, 0
    %p71 = por %p69, %p70
    %p72 = scmp.ne.s32.totalorder %s58, %s59
    %p73 = scmp.eq.s32.totalorder %s25, 1
    %p74 = por %p72, %p73
    %p76 = scmp.ne.s32.totalorder %s59, %s75
    %p77 = scmp.eq.s32.totalorder %s25, 0
    %p78 = por %p76, %p77
    %s80 = sadd.s32 %s79, 1
    %p83 = scmp.eq.s32.totalorder %s19, 1
    %p84 = scmp.ne.s32.totalorder %s79, %s81
    %p85 = scmp.eq.s32.totalorder %s19, 0
    %p86 = por %p84, %p85
    %p87 = scmp.ne.s32.totalorder %s79, %s81
    %p88 = scmp.eq.s32.totalorder %s24, 1
    %p89 = por %p87, %p88
    %p90 = scmp.ne.s32.totalorder %s81, %s82
    %p91 = scmp.eq.s32.totalorder %s24, 0
    %p92 = por %p90, %p91
    %p93 = scmp.ne.s32.totalorder %s81, %s82
    %p94 = scmp.eq.s32.totalorder %s25, 1
    %p95 = por %p93, %p94
    %p97 = scmp.ne.s32.totalorder %s82, %s96
    %p98 = scmp.eq.s32.totalorder %s25, 0
    %p99 = por %p97, %p98
    %s101 = sadd.s32 %s100, 1
    %p104 = scmp.eq.s32.totalorder %s19, 1
    %p105 = scmp.ne.s32.totalorder %s100, %s102
    %p106 = scmp.eq.s32.totalorder %s19, 0
    %p107 = por %p105, %p106
    %p108 = scmp.ne.s32.totalorder %s100, %s102
    %p109 = scmp.eq.s32.totalorder %s24, 1
    %p110 = por %p108, %p109
    %p111 = scmp.ne.s32.totalorder %s102, %s103
    %p112 = scmp.eq.s32.totalorder %s24, 0
    %p113 = por %p111, %p112
    %p114 = scmp.ne.s32.totalorder %s102, %s103
    %p115 = scmp.eq.s32.totalorder %s25, 1
    %p116 = por %p114, %p115
    %p118 = scmp.ne.s32.totalorder %s103, %s117
    %p119 = scmp.eq.s32.totalorder %s25, 0
    %p120 = por %p118, %p119
    %s122 = sadd.s32 %s121, 1
    %p125 = scmp.eq.s32.totalorder %s19, 1
    %p126 = scmp.ne.s32.totalorder %s121, %s123
    %p127 = scmp.eq.s32.totalorder %s19, 0
    %p128 = por %p126, %p127
    %p129 = scmp.ne.s32.totalorder %s121, %s123
    %p130 = scmp.eq.s32.totalorder %s24, 1
    %p131 = por %p129, %p130
    %p132 = scmp.ne.s32.totalorder %s123, %s124
    %p133 = scmp.eq.s32.totalorder %s24, 0
    %p134 = por %p132, %p133
    %p135 = scmp.ne.s32.totalorder %s123, %s124
    %p136 = scmp.eq.s32.totalorder %s25, 1
    %p137 = por %p135, %p136
    %p139 = scmp.ne.s32.totalorder %s124, %s138
    %p140 = scmp.eq.s32.totalorder %s25, 0
    %p141 = por %p139, %p140
    %s143 = sadd.s32 %s142, 1
    %p146 = scmp.eq.s32.totalorder %s19, 1
    %p147 = scmp.ne.s32.totalorder %s142, %s144
    %p148 = scmp.eq.s32.totalorder %s19, 0
    %p149 = por %p147, %p148
    %p150 = scmp.ne.s32.totalorder %s142, %s144
    %p151 = scmp.eq.s32.totalorder %s24, 1
    %p152 = por %p150, %p151
    %p153 = scmp.ne.s32.totalorder %s144, %s145
    %p154 = scmp.eq.s32.totalorder %s24, 0
    %p155 = por %p153, %p154
    %p156 = scmp.ne.s32.totalorder %s144, %s145
    %p157 = scmp.eq.s32.totalorder %s25, 1
    %p158 = por %p156, %p157
    %p160 = scmp.ne.s32.totalorder %s145, %s159
    %p161 = scmp.eq.s32.totalorder %s25, 0
    %p162 = por %p160, %p161
    %s164 = sadd.s32 %s163, 1
    %p167 = scmp.eq.s32.totalorder %s19, 1
    %p168 = scmp.ne.s32.totalorder %s163, %s165
    %p169 = scmp.eq.s32.totalorder %s19, 0
    %p170 = por %p168, %p169
    %p171 = scmp.ne.s32.totalorder %s163, %s165
    %p172 = scmp.eq.s32.totalorder %s24, 1
    %p173 = por %p171, %p172
    %p174 = scmp.ne.s32.totalorder %s165, %s166
    %p175 = scmp.eq.s32.totalorder %s24, 0
    %p176 = por %p174, %p175
    %p177 = scmp.ne.s32.totalorder %s165, %s166
    %p178 = scmp.eq.s32.totalorder %s25, 1
    %p179 = por %p177, %p178
    %p181 = scmp.ne.s32.totalorder %s166, %s180
    %p182 = scmp.eq.s32.totalorder %s25, 0
    %p183 = por %p181, %p182
    %s185 = sadd.s32 %s184, 1
    %p188 = scmp.eq.s32.totalorder %s19, 1
    %p189 = scmp.ne.s32.totalorder %s184, %s186
    %p190 = scmp.eq.s32.totalorder %s19, 0
    %p191 = por %p189, %p190
    %p192 = scmp.ne.s32.totalorder %s184, %s186
    %p193 = scmp.eq.s32.totalorder %s24, 1
    %p194 = por %p192, %p193
    %p195 = scmp.ne.s32.totalorder %s186, %s187
    %p196 = scmp.eq.s32.totalorder %s24, 0
    %p197 = por %p195, %p196
    %p198 = scmp.ne.s32.totalorder %s186, %s187
    %p199 = scmp.eq.s32.totalorder %s25, 1
    %p200 = por %p198, %p199
    %p202 = scmp.ne.s32.totalorder %s187, %s201
    %p203 = scmp.eq.s32.totalorder %s25, 0
    %p204 = por %p202, %p203
    %s206 = sadd.s32 %s205, 1
    %p209 = scmp.eq.s32.totalorder %s19, 1
    %p210 = scmp.ne.s32.totalorder %s205, %s207
    %p211 = scmp.eq.s32.totalorder %s19, 0
    %p212 = por %p210, %p211
    %p213 = scmp.ne.s32.totalorder %s205, %s207
    %p214 = scmp.eq.s32.totalorder %s24, 1
    %p215 = por %p213, %p214
    %p216 = scmp.ne.s32.totalorder %s207, %s208
    %p217 = scmp.eq.s32.totalorder %s24, 0
    %p218 = por %p216, %p217
    %p219 = scmp.ne.s32.totalorder %s207, %s208
    %p220 = scmp.eq.s32.totalorder %s25, 1
    %p221 = por %p219, %p220
    %p223 = scmp.ne.s32.totalorder %s208, %s222
    %p224 = scmp.eq.s32.totalorder %s25, 0
    %p225 = por %p223, %p224
    %s227 = sadd.s32 %s226, 1
    %p230 = scmp.eq.s32.totalorder %s19, 1
    %p231 = scmp.ne.s32.totalorder %s226, %s228
    %p232 = scmp.eq.s32.totalorder %s19, 0
    %p233 = por %p231, %p232
    %p234 = scmp.ne.s32.totalorder %s226, %s228
    %p235 = scmp.eq.s32.totalorder %s24, 1
    %p236 = por %p234, %p235
    %p237 = scmp.ne.s32.totalorder %s228, %s229
    %p238 = scmp.eq.s32.totalorder %s24, 0
    %p239 = por %p237, %p238
    %p240 = scmp.ne.s32.totalorder %s228, %s229
    %p241 = scmp.eq.s32.totalorder %s25, 1
    %p242 = por %p240, %p241
    %p244 = scmp.ne.s32.totalorder %s229, %s243
    %p245 = scmp.eq.s32.totalorder %s25, 0
    %p246 = por %p244, %p245
    %s248 = sadd.s32 %s247, 1
    %p251 = scmp.eq.s32.totalorder %s19, 1
    %p252 = scmp.ne.s32.totalorder %s247, %s249
    %p253 = scmp.eq.s32.totalorder %s19, 0
    %p254 = por %p252, %p253
    %p255 = scmp.ne.s32.totalorder %s247, %s249
    %p256 = scmp.eq.s32.totalorder %s24, 1
    %p257 = por %p255, %p256
    %p258 = scmp.ne.s32.totalorder %s249, %s250
    %p259 = scmp.eq.s32.totalorder %s24, 0
    %p260 = por %p258, %p259
    %p261 = scmp.ne.s32.totalorder %s249, %s250
    %p262 = scmp.eq.s32.totalorder %s25, 1
    %p263 = por %p261, %p262
    %p265 = scmp.ne.s32.totalorder %s250, %s264
    %p266 = scmp.eq.s32.totalorder %s25, 0
    %p267 = por %p265, %p266
    %s269 = sadd.s32 %s268, 1
    %p272 = scmp.eq.s32.totalorder %s19, 1
    %p273 = scmp.ne.s32.totalorder %s268, %s270
    %p274 = scmp.eq.s32.totalorder %s19, 0
    %p275 = por %p273, %p274
    %p276 = scmp.ne.s32.totalorder %s268, %s270
    %p277 = scmp.eq.s32.totalorder %s24, 1
    %p278 = por %p276, %p277
    %p279 = scmp.ne.s32.totalorder %s270, %s271
    %p280 = scmp.eq.s32.totalorder %s24, 0
    %p281 = por %p279, %p280
    %p282 = scmp.ne.s32.totalorder %s270, %s271
    %p283 = scmp.eq.s32.totalorder %s25, 1
    %p284 = por %p282, %p283
    %p286 = scmp.ne.s32.totalorder %s271, %s285
    %p287 = scmp.eq.s32.totalorder %s25, 0
    %p288 = por %p286, %p287
    %s290 = sadd.s32 %s289, 1
    %p293 = scmp.eq.s32.totalorder %s19, 1
    %p294 = scmp.ne.s32.totalorder %s289, %s291
    %p295 = scmp.eq.s32.totalorder %s19, 0
    %p296 = por %p294, %p295
    %p297 = scmp.ne.s32.totalorder %s289, %s291
    %p298 = scmp.eq.s32.totalorder %s24, 1
    %p299 = por %p297, %p298
    %p300 = scmp.ne.s32.totalorder %s291, %s292
    %p301 = scmp.eq.s32.totalorder %s24, 0
    %p302 = por %p300, %p301
    %p303 = scmp.ne.s32.totalorder %s291, %s292
    %p304 = scmp.eq.s32.totalorder %s25, 1
    %p305 = por %p303, %p304
    %p307 = scmp.ne.s32.totalorder %s292, %s306
    %p308 = scmp.eq.s32.totalorder %s25, 0
    %p309 = por %p307, %p308
    %s310 = ssub.s32 %s19, %s26
    %p311 = scmp.eq.s32.totalorder %s310, 0
    %s313 = sadd.s32 %s312, 1
    %s314 = scalar_select %p311, %s312, %s313
    %p317 = pneg %p311
    %p318 = scmp.eq.s32.totalorder %s19, 1
    %p319 = por %p317, %p318
    %p320 = scmp.ne.s32.totalorder %s312, %s315
    %p321 = scmp.eq.s32.totalorder %s19, 0
    %p322 = por %p320, %p321
    %p323 = scmp.ne.s32.totalorder %s312, %s315
    %p324 = scmp.eq.s32.totalorder %s24, 1
    %p325 = por %p323, %p324
    %p326 = scmp.ne.s32.totalorder %s315, %s316
    %p327 = scmp.eq.s32.totalorder %s24, 0
    %p328 = por %p326, %p327
    %p329 = scmp.ne.s32.totalorder %s315, %s316
    %p330 = scmp.eq.s32.totalorder %s25, 1
    %p331 = por %p329, %p330
    %p333 = scmp.ne.s32.totalorder %s316, %s332
    %p334 = scmp.eq.s32.totalorder %s25, 0
    %p335 = por %p333, %p334
    %p336 = scmp.le.s32.totalorder 1, %s19
    %p337 = scmp.lt.s32.totalorder %s19, 3
    %p338 = pnand %p336, %p337
    %p339 = pneg %p338
    // Predicated region
    $region9: #{tpu_custom_call.1} parent=5 // pred_check
      _
    $region10: #{tpu_custom_call.1} parent=5 // pred_check_branch
      %341 = sbr.rel (%p338) target = $region12
    $region11: #{tpu_custom_call.1} parent=5 // pred_region
      %s342 = ssub.s32 %s19, 1
      // Predicated region
      $region13: #{tpu_custom_call.1} parent=11 // pred_check
        %p343 = pneg %p92
      $region14: #{tpu_custom_call.1} parent=11 // pred_check_branch
        %345 = sbr.rel (%p343) target = $region16
      $region15: #{tpu_custom_call.1} parent=11 // pred_region
        _
      $region16: #{tpu_custom_call.1} parent=11 // pred_fallthru
        _
      // Predicated region
      $region17: #{tpu_custom_call.1} parent=11 // pred_check
        %p346 = pneg %p113
      $region18: #{tpu_custom_call.1} parent=11 // pred_check_branch
        %348 = sbr.rel (%p346) target = $region20
      $region19: #{tpu_custom_call.1} parent=11 // pred_region
        _
      $region20: #{tpu_custom_call.1} parent=11 // pred_fallthru
        _
      // Predicated region
      $region21: #{tpu_custom_call.1} parent=11 // pred_check
        %p349 = pneg %p134
      $region22: #{tpu_custom_call.1} parent=11 // pred_check_branch
        %351 = sbr.rel (%p349) target = $region24
      $region23: #{tpu_custom_call.1} parent=11 // pred_region
        _
      $region24: #{tpu_custom_call.1} parent=11 // pred_fallthru
        _
      // Predicated region
      $region25: #{tpu_custom_call.1} parent=11 // pred_check
        %p352 = pneg %p155
      $region26: #{tpu_custom_call.1} parent=11 // pred_check_branch
        %354 = sbr.rel (%p352) target = $region28
      $region27: #{tpu_custom_call.1} parent=11 // pred_region
        _
      $region28: #{tpu_custom_call.1} parent=11 // pred_fallthru
        _
      // Predicated region
      $region29: #{tpu_custom_call.1} parent=11 // pred_check
        %p355 = pneg %p176
      $region30: #{tpu_custom_call.1} parent=11 // pred_check_branch
        %357 = sbr.rel (%p355) target = $region32
      $region31: #{tpu_custom_call.1} parent=11 // pred_region
        _
      $region32: #{tpu_custom_call.1} parent=11 // pred_fallthru
        _
      // Predicated region
      $region33: #{tpu_custom_call.1} parent=11 // pred_check
        %p358 = pneg %p197
      $region34: #{tpu_custom_call.1} parent=11 // pred_check_branch
        %360 = sbr.rel (%p358) target = $region36
      $region35: #{tpu_custom_call.1} parent=11 // pred_region
        _
      $region36: #{tpu_custom_call.1} parent=11 // pred_fallthru
        _
      // Predicated region
      $region37: #{tpu_custom_call.1} parent=11 // pred_check
        %p361 = pneg %p218
      $region38: #{tpu_custom_call.1} parent=11 // pred_check_branch
        %363 = sbr.rel (%p361) target = $region40
      $region39: #{tpu_custom_call.1} parent=11 // pred_region
        _
      $region40: #{tpu_custom_call.1} parent=11 // pred_fallthru
        _
      // Predicated region
      $region41: #{tpu_custom_call.1} parent=11 // pred_check
        %p364 = pneg %p239
      $region42: #{tpu_custom_call.1} parent=11 // pred_check_branch
        %366 = sbr.rel (%p364) target = $region44
      $region43: #{tpu_custom_call.1} parent=11 // pred_region
        _
      $region44: #{tpu_custom_call.1} parent=11 // pred_fallthru
        _
      // Predicated region
      $region45: #{tpu_custom_call.1} parent=11 // pred_check
        %p367 = pneg %p260
      $region46: #{tpu_custom_call.1} parent=11 // pred_check_branch
        %369 = sbr.rel (%p367) target = $region48
      $region47: #{tpu_custom_call.1} parent=11 // pred_region
        _
      $region48: #{tpu_custom_call.1} parent=11 // pred_fallthru
        _
      // Predicated region
      $region49: #{tpu_custom_call.1} parent=11 // pred_check
        %p370 = pneg %p281
      $region50: #{tpu_custom_call.1} parent=11 // pred_check_branch
        %372 = sbr.rel (%p370) target = $region52
      $region51: #{tpu_custom_call.1} parent=11 // pred_region
        _
      $region52: #{tpu_custom_call.1} parent=11 // pred_fallthru
        _
      // Predicated region
      $region53: #{tpu_custom_call.1} parent=11 // pred_check
        %p373 = pneg %p302
      $region54: #{tpu_custom_call.1} parent=11 // pred_check_branch
        %375 = sbr.rel (%p373) target = $region56
      $region55: #{tpu_custom_call.1} parent=11 // pred_region
        _
      $region56: #{tpu_custom_call.1} parent=11 // pred_fallthru
        _
    $region12: #{tpu_custom_call.1} parent=5 // pred_fallthru
      _
    %p376 = scmp.lt.s32.totalorder %s19, 2
    // Predicated region
    $region57: #{tpu_custom_call.1} parent=5 // pred_check
      %p377 = pneg %p376
    $region58: #{tpu_custom_call.1} parent=5 // pred_check_branch
      %379 = sbr.rel (%p377) target = $region60
    $region59: #{tpu_custom_call.1} parent=5 // pred_region
      // Predicated region
      $region61: #{tpu_custom_call.1} parent=59 // pred_check
        %p380 = pneg %p39
      $region62: #{tpu_custom_call.1} parent=59 // pred_check_branch
        %382 = sbr.rel (%p380) target = $region64
      $region63: #{tpu_custom_call.1} parent=59 // pred_region
        %p383 = scmp.lt.s32.totalorder %s19, 1
        %s384 = scalar_select %p383, %s19, 1
        %s385 = smul.addr %s384, 2
        %s386 = smul.addr %s385, 4
        %s387 = scalar_lea.vmem %s0, %s386
      $region64: #{tpu_custom_call.1} parent=59 // pred_fallthru
        _
      // Predicated region
      $region65: #{tpu_custom_call.1} parent=59 // pred_check
        %p388 = pneg %p65
      $region66: #{tpu_custom_call.1} parent=59 // pred_check_branch
        %390 = sbr.rel (%p388) target = $region68
      $region67: #{tpu_custom_call.1} parent=59 // pred_region
        %p391 = scmp.lt.s32.totalorder %s19, 1
        %s392 = scalar_select %p391, %s19, 1
        %s393 = smul.addr %s392, 8
        %s394 = scalar_lea.vmem %s1, %s393
      $region68: #{tpu_custom_call.1} parent=59 // pred_fallthru
        _
    $region60: #{tpu_custom_call.1} parent=5 // pred_fallthru
      _
    %p395 = scmp.le.s32.totalorder 1, %s19
    %p396 = scmp.lt.s32.totalorder %s19, 3
    %p397 = pnand %p395, %p396
    %p398 = pneg %p397
    // Predicated region
    $region69: #{tpu_custom_call.1} parent=5 // pred_check
      _
    $region70: #{tpu_custom_call.1} parent=5 // pred_check_branch
      %400 = sbr.rel (%p397) target = $region72
    $region71: #{tpu_custom_call.1} parent=5 // pred_region
      %s401 = ssub.s32 %s19, 1
      %p402 = scmp.lt.s32.totalorder %s24, 1
      %s403 = scalar_select %p402, %s24, 1
      %s404 = smul.addr %s403, 2
      %s405 = smul.addr %s404, 4
      %s406 = scalar_lea.vmem %s0, %s405
      %p407 = pneg %p45
      %p408 = pneg %p42
      %p409 = scmp.lt.s32.totalorder %s24, 1
      %s410 = scalar_select %p409, %s24, 1
      %s411 = smul.addr %s410, 8
      %s412 = scalar_lea.vmem %s1, %s411
      %p413 = pneg %p71
      %p414 = pneg %p68
      %p415 = pneg %p92
      %p416 = pneg %p89
      %p417 = pneg %p113
      %p418 = pneg %p110
      %p419 = pneg %p134
      %p420 = pneg %p131
      %p421 = pneg %p155
      %p422 = pneg %p152
      %p423 = pneg %p176
      %p424 = pneg %p173
      %p425 = pneg %p197
      %p426 = pneg %p194
      %p427 = pneg %p218
      %p428 = pneg %p215
      %p429 = pneg %p239
      %p430 = pneg %p236
      %p431 = pneg %p260
      %p432 = pneg %p257
      %p433 = pneg %p281
      %p434 = pneg %p278
      %p435 = pneg %p302
      %p436 = pneg %p299
      %p437 = pneg %p328
      %p438 = pneg %p325
      %p439 = scmp.lt.s32.totalorder %s24, 1
      %s440 = scalar_select %p439, %s24, 1
      %s441 = smul.addr %s440, 8
      %s442 = scalar_lea.vmem %s13, %s441
      %p443 = scmp.lt.s32.totalorder %s24, 1
      %s444 = scalar_select %p443, %s24, 1
      %s445 = smul.addr %s444, 2
      %s446 = smul.addr %s445, 4
      %s447 = scalar_lea.vmem %s0, %s446
      %p448 = scmp.lt.s32.totalorder %s24, 1
      %s449 = scalar_select %p448, %s24, 1
      %s450 = smul.addr %s449, 8
      %s451 = scalar_lea.vmem %s1, %s450
      %p452 = scmp.lt.s32.totalorder %s24, 1
      %s453 = scalar_select %p452, %s24, 1
      %s454 = smul.addr %s453, 8
      %s455 = scalar_lea.vmem %s13, %s454
      %v456 = vld [vmem:[%s447] sm:$0x77]
      %v457 = vld [vmem:[%s2] sm:$0xff]
      %v458 = vld [vmem:[%s2 + $0x8] sm:$0xff]
      %v459 = vld [vmem:[%s2 + $0x10] sm:$0xff]
      %v460 = vld [vmem:[%s2 + $0x18] sm:$0xff]
      %462 = vset.pattern.permute.xlu0 0
      %463 = vperm.xlu0 %462, %v457
      %v464 = vpop.permute.xlu0 %463
      %467 = vset.pattern.permute.xlu0 0
      %468 = vperm.xlu0 %467, %v458
      %v469 = vpop.permute.xlu0 %468
      %472 = vset.pattern.permute.xlu0 0
      %473 = vperm.xlu0 %472, %v459
      %v474 = vpop.permute.xlu0 %473
      %477 = vset.pattern.permute.xlu0 0
      %478 = vperm.xlu0 %477, %v460
      %v479 = vpop.permute.xlu0 %478
      %v482 = vlaneseq
      %v483 = vshrl.u32 %v482, 7
      %v484 = vsub.s32 0, %v483
      %v485 = vrot.slane %v456, %v484
      %v486 = vlaneseq
      %v487 = vshrl.u32 %v486, 7
      %v488 = vsub.s32 4, %v487
      %v489 = vrot.slane %v456, %v488
      %v492 = vlaneseq
      %v493 = vshrl.u32 %v492, 7
      %v494 = vsub.s32 0, %v493
      %v495 = vrot.slane %v485, %v494
      %v496 = vlaneseq
      %v497 = vshrl.u32 %v496, 7
      %v498 = vsub.s32 0, %v497
      %v499 = vrot.slane %v489, %v498
      %v500 = vmul.f32 %v464, %v495
      %v501 = vmul.f32 %v464, %v499
      %v502 = vmul.f32 %v469, %v495
      %v503 = vmul.f32 %v469, %v499
      %v504 = vmul.f32 %v474, %v495
      %v505 = vmul.f32 %v474, %v499
      %v506 = vmul.f32 %v479, %v495
      %v507 = vmul.f32 %v479, %v499
      %508 = vset.pattern.permute.xlu0 1
      %509 = vperm.xlu0 %508, %v457
      %v510 = vpop.permute.xlu0 %509
      %512 = vset.pattern.permute.xlu0 1
      %513 = vperm.xlu0 %512, %v458
      %v514 = vpop.permute.xlu0 %513
      %516 = vset.pattern.permute.xlu0 1
      %517 = vperm.xlu0 %516, %v459
      %v518 = vpop.permute.xlu0 %517
      %520 = vset.pattern.permute.xlu0 1
      %521 = vperm.xlu0 %520, %v460
      %v522 = vpop.permute.xlu0 %521
      %v524 = vlaneseq
      %v525 = vshrl.u32 %v524, 7
      %v526 = vsub.s32 1, %v525
      %v527 = vrot.slane %v456, %v526
      %v528 = vlaneseq
      %v529 = vshrl.u32 %v528, 7
      %v530 = vsub.s32 5, %v529
      %v531 = vrot.slane %v456, %v530
      %v534 = vlaneseq
      %v535 = vshrl.u32 %v534, 7
      %v536 = vsub.s32 1, %v535
      %v537 = vrot.slane %v527, %v536
      %v538 = vlaneseq
      %v539 = vshrl.u32 %v538, 7
      %v540 = vsub.s32 1, %v539
      %v541 = vrot.slane %v531, %v540
      %v542 = vmul.f32 %v510, %v537
      %v543 = vmul.f32 %v510, %v541
      %v544 = vmul.f32 %v514, %v537
      %v545 = vmul.f32 %v514, %v541
      %v546 = vmul.f32 %v518, %v537
      %v547 = vmul.f32 %v518, %v541
      %v548 = vmul.f32 %v522, %v537
      %v549 = vmul.f32 %v522, %v541
      %v550 = vadd.f32 %v500, %v542
      %v551 = vadd.f32 %v501, %v543
      %v552 = vadd.f32 %v502, %v544
      %v553 = vadd.f32 %v503, %v545
      %v554 = vadd.f32 %v504, %v546
      %v555 = vadd.f32 %v505, %v547
      %v556 = vadd.f32 %v506, %v548
      %v557 = vadd.f32 %v507, %v549
      %558 = vset.pattern.permute.xlu0 2
      %559 = vperm.xlu0 %558, %v457
      %v560 = vpop.permute.xlu0 %559
      %562 = vset.pattern.permute.xlu0 2
      %563 = vperm.xlu0 %562, %v458
      %v564 = vpop.permute.xlu0 %563
      %566 = vset.pattern.permute.xlu0 2
      %567 = vperm.xlu0 %566, %v459
      %v568 = vpop.permute.xlu0 %567
      %570 = vset.pattern.permute.xlu0 2
      %571 = vperm.xlu0 %570, %v460
      %v572 = vpop.permute.xlu0 %571
      %v574 = vlaneseq
      %v575 = vshrl.u32 %v574, 7
      %v576 = vsub.s32 2, %v575
      %v577 = vrot.slane %v456, %v576
      %v578 = vlaneseq
      %v579 = vshrl.u32 %v578, 7
      %v580 = vsub.s32 6, %v579
      %v581 = vrot.slane %v456, %v580
      %v584 = vlaneseq
      %v585 = vshrl.u32 %v584, 7
      %v586 = vsub.s32 2, %v585
      %v587 = vrot.slane %v577, %v586
      %v588 = vlaneseq
      %v589 = vshrl.u32 %v588, 7
      %v590 = vsub.s32 2, %v589
      %v591 = vrot.slane %v581, %v590
      %v592 = vmul.f32 %v560, %v587
      %v593 = vmul.f32 %v560, %v591
      %v594 = vmul.f32 %v564, %v587
      %v595 = vmul.f32 %v564, %v591
      %v596 = vmul.f32 %v568, %v587
      %v597 = vmul.f32 %v568, %v591
      %v598 = vmul.f32 %v572, %v587
      %v599 = vmul.f32 %v572, %v591
      %v600 = vadd.f32 %v550, %v592
      %v601 = vadd.f32 %v551, %v593
      %v602 = vadd.f32 %v552, %v594
      %v603 = vadd.f32 %v553, %v595
      %v604 = vadd.f32 %v554, %v596
      %v605 = vadd.f32 %v555, %v597
      %v606 = vadd.f32 %v556, %v598
      %v607 = vadd.f32 %v557, %v599
      %v608 = vld [vmem:[%s3] sm:$0xff]
      %v609 = vld [vmem:[%s3 + $0x8] sm:$0xff]
      %v610 = vld [vmem:[%s3 + $0x10] sm:$0xff]
      %v611 = vld [vmem:[%s3 + $0x18] sm:$0xff]
      %613 = vset.pattern.permute.xlu0 0
      %614 = vperm.xlu0 %613, %v608
      %v615 = vpop.permute.xlu0 %614
      %618 = vset.pattern.permute.xlu0 0
      %619 = vperm.xlu0 %618, %v609
      %v620 = vpop.permute.xlu0 %619
      %623 = vset.pattern.permute.xlu0 0
      %624 = vperm.xlu0 %623, %v610
      %v625 = vpop.permute.xlu0 %624
      %628 = vset.pattern.permute.xlu0 0
      %629 = vperm.xlu0 %628, %v611
      %v630 = vpop.permute.xlu0 %629
      %v632 = vadd.f32 %v600, %v615
      %v633 = vadd.f32 %v601, %v615
      %v634 = vadd.f32 %v602, %v620
      %v635 = vadd.f32 %v603, %v620
      %v636 = vadd.f32 %v604, %v625
      %v637 = vadd.f32 %v605, %v625
      %v638 = vadd.f32 %v606, %v630
      %v639 = vadd.f32 %v607, %v630
      %v640 = vmax.f32 %v632, 0.0
      %v641 = vmax.f32 %v633, 0.0
      %v642 = vmax.f32 %v634, 0.0
      %v643 = vmax.f32 %v635, 0.0
      %v644 = vmax.f32 %v636, 0.0
      %v645 = vmax.f32 %v637, 0.0
      %v646 = vmax.f32 %v638, 0.0
      %v647 = vmax.f32 %v639, 0.0
      %v648 = vadd.f32 %v640, %v641
      %649 = vadd.xlane.f32.xlu0 %v648
      %v650 = vpop.xlane.xlu0 %649
      %v651 = vadd.f32 %v642, %v643
      %652 = vadd.xlane.f32.xlu0 %v651
      %v653 = vpop.xlane.xlu0 %652
      %v654 = vadd.f32 %v644, %v645
      %655 = vadd.xlane.f32.xlu0 %v654
      %v656 = vpop.xlane.xlu0 %655
      %v657 = vadd.f32 %v646, %v647
      %658 = vadd.xlane.f32.xlu0 %v657
      %v659 = vpop.xlane.xlu0 %658
      %v660 = vrcp.pop 256.0
      %v661 = vmul.f32 %v650, %v660
      %v662 = vmul.f32 %v653, %v660
      %v663 = vmul.f32 %v656, %v660
      %v664 = vmul.f32 %v659, %v660
      %v665 = vld [vmem:[%s4] sm:$0xff]
      %v666 = vld [vmem:[%s4 + $0x8] sm:$0xff]
      %v667 = vld [vmem:[%s4 + $0x10] sm:$0xff]
      %v668 = vld [vmem:[%s4 + $0x18] sm:$0xff]
      %v669 = vld [vmem:[%s5] sm:$0x1]
      %v674 = vlaneseq
      %v675 = vand.u32 %v674, 127
      %v676 = vlaneseq
      %v677 = vshrl.u32 %v676, 7
      %v678 = vsub.s32 %v675, %v677
      %v679 = vrot.slane %v661, %v678
      %v680 = vadd.s32 %v675, 4294967288
      %v681 = vlaneseq
      %v682 = vshrl.u32 %v681, 7
      %v683 = vsub.s32 %v680, %v682
      %v684 = vrot.slane %v662, %v683
      %vm685 = vcmask 130112
      %v686 = vsel %vm685, %v684, %v679
      %v687 = vadd.s32 %v675, 4294967280
      %v688 = vlaneseq
      %v689 = vshrl.u32 %v688, 7
      %v690 = vsub.s32 %v687, %v689
      %v691 = vrot.slane %v663, %v690
      %vm692 = vcmask 195712
      %v693 = vsel %vm692, %v691, %v686
      %v694 = vadd.s32 %v675, 4294967272
      %v695 = vlaneseq
      %v696 = vshrl.u32 %v695, 7
      %v697 = vsub.s32 %v694, %v696
      %v698 = vrot.slane %v664, %v697
      %vm699 = vcmask 261312
      %v700 = vsel %vm699, %v698, %v693
      %vm701 = vcmask 261120
      %v702 = vsel %vm701, %v700, 0
      %704 = vmatprep.subr.mxu0 0.0
      %705 = vmatpush1.msra.mxu0 0.0
      %706 = vmatprep.subr.mxu0 0.0
      %707 = vmatpush1.msra.mxu0 0.0
      %708 = vmatprep.subr.mxu0 0.0
      %709 = vmatpush1.msra.mxu0 0.0
      %710 = vmatprep.subr.mxu0 0.0
      %711 = vmatpush1.msra.mxu0 0.0
      %712 = vmatprep.subr.mxu0 0.0
      %713 = vmatpush1.msra.mxu0 0.0
      %714 = vmatprep.subr.mxu0 0.0
      %715 = vmatpush1.msra.mxu0 0.0
      %716 = vmatprep.subr.mxu0 0.0
      %717 = vmatpush1.msra.mxu0 0.0
      %718 = vmatprep.subr.mxu0 0.0
      %719 = vmatpush1.msra.mxu0 0.0
      %720 = vmatprep.subr.mxu0 0.0
      %721 = vmatpush1.msra.mxu0 0.0
      %722 = vmatprep.subr.mxu0 0.0
      %723 = vmatpush1.msra.mxu0 0.0
      %724 = vmatprep.subr.mxu0 0.0
      %725 = vmatpush1.msra.mxu0 0.0
      %726 = vmatprep.subr.mxu0 0.0
      %727 = vmatpush1.msra.mxu0 0.0
      %728 = vmatprep.subr.mxu0 0.0
      %729 = vmatpush1.msra.mxu0 %v668
      %730 = vmatprep.subr.mxu0 0.0
      %731 = vmatpush1.msra.mxu0 %v667
      %732 = vmatprep.subr.mxu0 0.0
      %733 = vmatpush1.msra.mxu0 %v666
      %734 = vmatprep.subr.mxu0 0.0
      %735 = vmatpush1.msra.mxu0 %v665
      %736 = vmatprep.subr.mxu0 0.0
      %737 = vmatpush2.msra.mxu0 0.0
      %738 = vmatprep.subr.mxu0 0.0
      %739 = vmatpush2.msra.mxu0 0.0
      %740 = vmatprep.subr.mxu0 0.0
      %741 = vmatpush2.msra.mxu0 0.0
      %742 = vmatprep.subr.mxu0 0.0
      %743 = vmatpush2.msra.mxu0 0.0
      %744 = vmatprep.subr.mxu0 0.0
      %745 = vmatpush2.msra.mxu0 0.0
      %746 = vmatprep.subr.mxu0 0.0
      %747 = vmatpush2.msra.mxu0 0.0
      %748 = vmatprep.subr.mxu0 0.0
      %749 = vmatpush2.msra.mxu0 0.0
      %750 = vmatprep.subr.mxu0 0.0
      %751 = vmatpush2.msra.mxu0 0.0
      %752 = vmatprep.subr.mxu0 0.0
      %753 = vmatpush2.msra.mxu0 0.0
      %754 = vmatprep.subr.mxu0 0.0
      %755 = vmatpush2.msra.mxu0 0.0
      %756 = vmatprep.subr.mxu0 0.0
      %757 = vmatpush2.msra.mxu0 0.0
      %758 = vmatprep.subr.mxu0 0.0
      %759 = vmatpush2.msra.mxu0 0.0
      %760 = vmatprep.subr.mxu0 0.0
      %761 = vmatpush2.msra.mxu0 0.0
      %762 = vmatprep.subr.mxu0 0.0
      %763 = vmatpush2.msra.mxu0 0.0
      %764 = vmatprep.subr.mxu0 0.0
      %765 = vmatpush2.msra.mxu0 0.0
      %766 = vmatprep.subr.mxu0 0.0
      %767 = vmatpush2.msra.mxu0 0.0
      %768 = vmatprep.mubr.f32.mxu0 0.0
      %769 = vmatmul.mubr.f32.gmra.mxu0 %v702
      %v770 = vpop.f32.mrf.mxu0
      %v771 = vadd.f32 %v669, %v770
      %v772 = vpop.f32.mrf.mxu0
      %773 = vdwg.mxu0
      %v774 = vld [vmem:[%s451] sm:$0xff]
      %v775 = vld [vmem:[%s6] sm:$0xff]
      %v776 = vld [vmem:[%s6 + $0x8] sm:$0xff]
      %vm777 = vcmask 130048
      %v779 = vsel %vm777, %v771, 0
      %781 = vmatprep.subr.mxu0 0.0
      %782 = vmatpush1.msra.mxu0 0.0
      %783 = vmatprep.subr.mxu0 0.0
      %784 = vmatpush1.msra.mxu0 0.0
      %785 = vmatprep.subr.mxu0 0.0
      %786 = vmatpush1.msra.mxu0 0.0
      %787 = vmatprep.subr.mxu0 0.0
      %788 = vmatpush1.msra.mxu0 0.0
      %789 = vmatprep.subr.mxu0 0.0
      %790 = vmatpush1.msra.mxu0 0.0
      %791 = vmatprep.subr.mxu0 0.0
      %792 = vmatpush1.msra.mxu0 0.0
      %793 = vmatprep.subr.mxu0 0.0
      %794 = vmatpush1.msra.mxu0 0.0
      %795 = vmatprep.subr.mxu0 0.0
      %796 = vmatpush1.msra.mxu0 0.0
      %797 = vmatprep.subr.mxu0 0.0
      %798 = vmatpush1.msra.mxu0 0.0
      %799 = vmatprep.subr.mxu0 0.0
      %800 = vmatpush1.msra.mxu0 0.0
      %801 = vmatprep.subr.mxu0 0.0
      %802 = vmatpush1.msra.mxu0 0.0
      %803 = vmatprep.subr.mxu0 0.0
      %804 = vmatpush1.msra.mxu0 0.0
      %805 = vmatprep.subr.mxu0 0.0
      %806 = vmatpush1.msra.mxu0 0.0
      %807 = vmatprep.subr.mxu0 0.0
      %808 = vmatpush1.msra.mxu0 0.0
      %809 = vmatprep.subr.mxu0 0.0
      %810 = vmatpush1.msra.mxu0 %v776
      %811 = vmatprep.subr.mxu0 0.0
      %812 = vmatpush1.msra.mxu0 %v775
      %813 = vmatprep.subr.mxu0 0.0
      %814 = vmatpush2.msra.mxu0 0.0
      %815 = vmatprep.subr.mxu0 0.0
      %816 = vmatpush2.msra.mxu0 0.0
      %817 = vmatprep.subr.mxu0 0.0
      %818 = vmatpush2.msra.mxu0 0.0
      %819 = vmatprep.subr.mxu0 0.0
      %820 = vmatpush2.msra.mxu0 0.0
      %821 = vmatprep.subr.mxu0 0.0
      %822 = vmatpush2.msra.mxu0 0.0
      %823 = vmatprep.subr.mxu0 0.0
      %824 = vmatpush2.msra.mxu0 0.0
      %825 = vmatprep.subr.mxu0 0.0
      %826 = vmatpush2.msra.mxu0 0.0
      %827 = vmatprep.subr.mxu0 0.0
      %828 = vmatpush2.msra.mxu0 0.0
      %829 = vmatprep.subr.mxu0 0.0
      %830 = vmatpush2.msra.mxu0 0.0
      %831 = vmatprep.subr.mxu0 0.0
      %832 = vmatpush2.msra.mxu0 0.0
      %833 = vmatprep.subr.mxu0 0.0
      %834 = vmatpush2.msra.mxu0 0.0
      %835 = vmatprep.subr.mxu0 0.0
      %836 = vmatpush2.msra.mxu0 0.0
      %837 = vmatprep.subr.mxu0 0.0
      %838 = vmatpush2.msra.mxu0 0.0
      %839 = vmatprep.subr.mxu0 0.0
      %840 = vmatpush2.msra.mxu0 0.0
      %841 = vmatprep.subr.mxu0 0.0
      %842 = vmatpush2.msra.mxu0 0.0
      %843 = vmatprep.subr.mxu0 0.0
      %844 = vmatpush2.msra.mxu0 0.0
      %845 = vmatprep.mubr.f32.mxu0 0.0
      %846 = vmatmul.mubr.f32.gmra.mxu0 %v779
      %v847 = vpop.f32.mrf.mxu0
      %v848 = vadd.f32 0.0, %v847
      %v849 = vpop.f32.mrf.mxu0
      %850 = vdwg.mxu0
      %v851 = vlaneseq
      %v852 = vshrl.u32 %v851, 7
      %v853 = vsub.s32 0, %v852
      %v854 = vrot.slane %v848, %v853
      %v855 = vld [vmem:[%s7] sm:$0xff]
      %v856 = vld [vmem:[%s7 + $0x8] sm:$0x7f]
      %858 = vset.pattern.permute.xlu0 0
      %859 = vperm.xlu0 %858, %v774
      %v860 = vpop.permute.xlu0 %859
      %v862 = vlaneseq
      %v863 = vshrl.u32 %v862, 7
      %v864 = vsub.s32 0, %v863
      %v865 = vrot.slane %v855, %v864
      %v866 = vmul.f32 %v860, %v865
      %v867 = vadd.f32 %v854, %v866
      %868 = vset.pattern.permute.xlu0 1
      %869 = vperm.xlu0 %868, %v774
      %v870 = vpop.permute.xlu0 %869
      %v872 = vlaneseq
      %v873 = vshrl.u32 %v872, 7
      %v874 = vsub.s32 1, %v873
      %v875 = vrot.slane %v855, %v874
      %v876 = vmul.f32 %v870, %v875
      %v877 = vadd.f32 %v867, %v876
      %878 = vset.pattern.permute.xlu0 2
      %879 = vperm.xlu0 %878, %v774
      %v880 = vpop.permute.xlu0 %879
      %v882 = vlaneseq
      %v883 = vshrl.u32 %v882, 7
      %v884 = vsub.s32 2, %v883
      %v885 = vrot.slane %v855, %v884
      %v886 = vmul.f32 %v880, %v885
      %v887 = vadd.f32 %v877, %v886
      %v888 = vand.u32 2147483647, %v774
      %vm889 = vcmp.le.f32.partialorder %v888, 0.7853982
      %vm890 = vcmp.lt.s32.totalorder %v774, 0
      %v891 = vand.u32 %v774, 2139095040
      %v892 = vshrl.u32 %v891, 23
      %v893 = vsub.s32 %v892, 127
      %v894 = vand.u32 2147483647, %v774
      %v895 = vand.u32 %v894, 8388607
      %v896 = vor.u32 %v895, 8388608
      %v897 = vsub.s32 0, %v896
      %v898 = vadd.s32 %v893, 1
      %vm899 = vcmp.gt.s32.totalorder %v898, 0
      %v900 = vsel %vm899, %v898, 0
      %v901 = vshrl.u32 %v900, 5
      %v902 = vand.u32 %v900, 31
      %v903 = vsub.s32 32, %v902
      %v904 = vshrl.u32 683565275, %v903
      %v905 = vshll.u32 683565275, %v902
      %v906 = vshrl.u32 2475754826, %v903
      %v907 = vor.u32 %v905, %v906
      %v908 = vshll.u32 2475754826, %v902
      %v909 = vshrl.u32 2131351028, %v903
      %v910 = vor.u32 %v908, %v909
      %v911 = vshll.u32 2131351028, %v902
      %v912 = vshrl.u32 2102212464, %v903
      %v913 = vor.u32 %v911, %v912
      %v914 = vshll.u32 2102212464, %v902
      %v915 = vshrl.u32 920167782, %v903
      %v916 = vor.u32 %v914, %v915
      %v917 = vshll.u32 920167782, %v902
      %v918 = vshrl.u32 1326507024, %v903
      %v919 = vor.u32 %v917, %v918
      %vm920 = vcmp.lt.s32.totalorder %v901, 1
      %vm921 = vcmp.lt.s32.totalorder %v901, 2
      %vm922 = vcmp.lt.s32.totalorder %v901, 3
      %vm923 = vcmp.lt.s32.totalorder %v901, 4
      %v924 = vsel %vm920, %v904, %v907
      %v925 = vsel %vm923, %v913, 2102212464
      %v926 = vsel %vm922, %v910, %v925
      %v927 = vsel %vm921, %v924, %v926
      %v928 = vsel %vm920, %v907, %v910
      %v929 = vsel %vm923, %v916, 920167782
      %v930 = vsel %vm922, %v913, %v929
      %v931 = vsel %vm921, %v928, %v930
      %v932 = vsel %vm920, %v910, %v913
      %v933 = vsel %vm923, %v919, 1326507024
      %v934 = vsel %vm922, %v916, %v933
      %v935 = vsel %vm921, %v932, %v934
      %v936 = vshll.u32 %v896, 8
      %v937 = vmul.u32.u64.compose %v936, %v935
      %v938 = vextract.low.u32 %v937
      %v939 = vextract.high.u32 %v937
      %v940 = vmul.u32.u64.compose %v936, %v931
      %v941 = vextract.low.u32 %v940
      %v942 = vextract.high.u32 %v940
      %v943 = vmul.u32 %v936, %v927
      %v944 = vadd.s32 %v939, %v941
      %vm945 = vc.u32 %v939, %v941
      %v946 = vadd.s32 %v942, 1
      %v947 = vsel %vm945, %v946, %v942
      %v948 = vadd.s32 %v943, %v947
      %v949 = vadd.s32 %v948, 536870912
      %v950 = vshrl.u32 %v949, 30
      %v951 = vshll.u32 %v950, 30
      %v952 = vsub.s32 %v948, %v951
      %vm953 = vcmp.lt.s32.totalorder %v952, 0
      %v954 = vsub.s32 0, %v952
      %v955 = vsel %vm953, %v954, %v952
      %v956 = vclz %v955
      %v957 = vsub.s32 %v956, 2
      %vm958 = vcmp.gt.s32.totalorder 0, %v957
      %v959 = vsel %vm958, 0, %v957
      %v960 = vsub.s32 32, %v959
      %v961 = vshll.u32 %v952, %v959
      %v962 = vshrl.u32 %v944, %v960
      %v963 = vor.u32 %v961, %v962
      %v964 = vsub.s32 4294967266, %v959
      %v965 = vadd.s32 %v964, 127
      %v966 = vshll.u32 %v965, 23
      %v967 = vor.u32 4788187, %v966
      %v968 = vand.u32 2147483647, %v967
      %v970 = vcvt.s32.f32 %v963
      %v971 = vmul.f32 %v970, %v968
      %v972 = vxor.u32 %v971, 2147483648
      %v973 = vsel %vm890, %v972, %v971
      %v974 = vsub.s32 4, %v950
      %v975 = vsel %vm890, %v974, %v950
      %v976 = vsel %vm889, %v774, %v973
      %v977 = vsel %vm889, 0, %v975
      %v978 = vcosq.f32.pop %v976
      %v979 = vsinq.f32.pop %v976
      %vm980 = vweird.f32 %v774
      %v981 = vadd.s32 %v977, 3
      %v982 = vand.u32 %v981, 3
      %vm983 = vcmp.lt.s32.totalorder %v982, 2
      %vm984 = vcmp.eq.s32.totalorder %v982, 0
      %v985 = vxor.u32 %v979, 2147483648
      %v986 = vsel %vm984, %v978, %v985
      %vm987 = vcmp.eq.s32.totalorder %v982, 2
      %v988 = vxor.u32 %v978, 2147483648
      %v989 = vsel %vm987, %v988, %v979
      %v990 = vsel %vm983, %v986, %v989
      %v991 = vsel %vm980, nan, %v990
      %993 = vset.pattern.permute.xlu0 0
      %994 = vperm.xlu0 %993, %v991
      %v995 = vpop.permute.xlu0 %994
      %v997 = vlaneseq
      %v998 = vshrl.u32 %v997, 7
      %v999 = vsub.s32 3, %v998
      %v1000 = vrot.slane %v855, %v999
      %v1001 = vmul.f32 %v995, %v1000
      %v1002 = vadd.f32 %v887, %v1001
      %1003 = vset.pattern.permute.xlu0 1
      %1004 = vperm.xlu0 %1003, %v991
      %v1005 = vpop.permute.xlu0 %1004
      %v1007 = vlaneseq
      %v1008 = vshrl.u32 %v1007, 7
      %v1009 = vsub.s32 4, %v1008
      %v1010 = vrot.slane %v855, %v1009
      %v1011 = vmul.f32 %v1005, %v1010
      %v1012 = vadd.f32 %v1002, %v1011
      %1013 = vset.pattern.permute.xlu0 2
      %1014 = vperm.xlu0 %1013, %v991
      %v1015 = vpop.permute.xlu0 %1014
      %v1017 = vlaneseq
      %v1018 = vshrl.u32 %v1017, 7
      %v1019 = vsub.s32 5, %v1018
      %v1020 = vrot.slane %v855, %v1019
      %v1021 = vmul.f32 %v1015, %v1020
      %v1022 = vadd.f32 %v1012, %v1021
      %v1023 = vand.u32 2147483647, %v774
      %vm1024 = vcmp.le.f32.partialorder %v1023, 0.7853982
      %vm1025 = vcmp.lt.s32.totalorder %v774, 0
      %v1026 = vand.u32 %v774, 2139095040
      %v1027 = vshrl.u32 %v1026, 23
      %v1028 = vsub.s32 %v1027, 127
      %v1029 = vand.u32 2147483647, %v774
      %v1030 = vand.u32 %v1029, 8388607
      %v1031 = vor.u32 %v1030, 8388608
      %v1032 = vsub.s32 0, %v1031
      %v1033 = vadd.s32 %v1028, 1
      %vm1034 = vcmp.gt.s32.totalorder %v1033, 0
      %v1035 = vsel %vm1034, %v1033, 0
      %v1036 = vshrl.u32 %v1035, 5
      %v1037 = vand.u32 %v1035, 31
      %v1038 = vsub.s32 32, %v1037
      %v1039 = vshrl.u32 683565275, %v1038
      %v1040 = vshll.u32 683565275, %v1037
      %v1041 = vshrl.u32 2475754826, %v1038
      %v1042 = vor.u32 %v1040, %v1041
      %v1043 = vshll.u32 2475754826, %v1037
      %v1044 = vshrl.u32 2131351028, %v1038
      %v1045 = vor.u32 %v1043, %v1044
      %v1046 = vshll.u32 2131351028, %v1037
      %v1047 = vshrl.u32 2102212464, %v1038
      %v1048 = vor.u32 %v1046, %v1047
      %v1049 = vshll.u32 2102212464, %v1037
      %v1050 = vshrl.u32 920167782, %v1038
      %v1051 = vor.u32 %v1049, %v1050
      %v1052 = vshll.u32 920167782, %v1037
      %v1053 = vshrl.u32 1326507024, %v1038
      %v1054 = vor.u32 %v1052, %v1053
      %vm1055 = vcmp.lt.s32.totalorder %v1036, 1
      %vm1056 = vcmp.lt.s32.totalorder %v1036, 2
      %vm1057 = vcmp.lt.s32.totalorder %v1036, 3
      %vm1058 = vcmp.lt.s32.totalorder %v1036, 4
      %v1059 = vsel %vm1055, %v1039, %v1042
      %v1060 = vsel %vm1058, %v1048, 2102212464
      %v1061 = vsel %vm1057, %v1045, %v1060
      %v1062 = vsel %vm1056, %v1059, %v1061
      %v1063 = vsel %vm1055, %v1042, %v1045
      %v1064 = vsel %vm1058, %v1051, 920167782
      %v1065 = vsel %vm1057, %v1048, %v1064
      %v1066 = vsel %vm1056, %v1063, %v1065
      %v1067 = vsel %vm1055, %v1045, %v1048
      %v1068 = vsel %vm1058, %v1054, 1326507024
      %v1069 = vsel %vm1057, %v1051, %v1068
      %v1070 = vsel %vm1056, %v1067, %v1069
      %v1071 = vshll.u32 %v1031, 8
      %v1072 = vmul.u32.u64.compose %v1071, %v1070
      %v1073 = vextract.low.u32 %v1072
      %v1074 = vextract.high.u32 %v1072
      %v1075 = vmul.u32.u64.compose %v1071, %v1066
      %v1076 = vextract.low.u32 %v1075
      %v1077 = vextract.high.u32 %v1075
      %v1078 = vmul.u32 %v1071, %v1062
      %v1079 = vadd.s32 %v1074, %v1076
      %vm1080 = vc.u32 %v1074, %v1076
      %v1081 = vadd.s32 %v1077, 1
      %v1082 = vsel %vm1080, %v1081, %v1077
      %v1083 = vadd.s32 %v1078, %v1082
      %v1084 = vadd.s32 %v1083, 536870912
      %v1085 = vshrl.u32 %v1084, 30
      %v1086 = vshll.u32 %v1085, 30
      %v1087 = vsub.s32 %v1083, %v1086
      %vm1088 = vcmp.lt.s32.totalorder %v1087, 0
      %v1089 = vsub.s32 0, %v1087
      %v1090 = vsel %vm1088, %v1089, %v1087
      %v1091 = vclz %v1090
      %v1092 = vsub.s32 %v1091, 2
      %vm1093 = vcmp.gt.s32.totalorder 0, %v1092
      %v1094 = vsel %vm1093, 0, %v1092
      %v1095 = vsub.s32 32, %v1094
      %v1096 = vshll.u32 %v1087, %v1094
      %v1097 = vshrl.u32 %v1079, %v1095
      %v1098 = vor.u32 %v1096, %v1097
      %v1099 = vsub.s32 4294967266, %v1094
      %v1100 = vadd.s32 %v1099, 127
      %v1101 = vshll.u32 %v1100, 23
      %v1102 = vor.u32 4788187, %v1101
      %v1103 = vand.u32 2147483647, %v1102
      %v1105 = vcvt.s32.f32 %v1098
      %v1106 = vmul.f32 %v1105, %v1103
      %v1107 = vxor.u32 %v1106, 2147483648
      %v1108 = vsel %vm1025, %v1107, %v1106
      %v1109 = vsub.s32 4, %v1085
      %v1110 = vsel %vm1025, %v1109, %v1085
      %v1111 = vsel %vm1024, %v774, %v1108
      %v1112 = vsel %vm1024, 0, %v1110
      %v1113 = vcosq.f32.pop %v1111
      %v1114 = vsinq.f32.pop %v1111
      %vm1115 = vweird.f32 %v774
      %v1116 = vand.u32 %v1112, 3
      %vm1117 = vcmp.lt.s32.totalorder %v1116, 2
      %vm1118 = vcmp.eq.s32.totalorder %v1116, 0
      %v1119 = vxor.u32 %v1114, 2147483648
      %v1120 = vsel %vm1118, %v1113, %v1119
      %vm1121 = vcmp.eq.s32.totalorder %v1116, 2
      %v1122 = vxor.u32 %v1113, 2147483648
      %v1123 = vsel %vm1121, %v1122, %v1114
      %v1124 = vsel %vm1117, %v1120, %v1123
      %v1125 = vsel %vm1115, nan, %v1124
      %1127 = vset.pattern.permute.xlu0 0
      %1128 = vperm.xlu0 %1127, %v1125
      %v1129 = vpop.permute.xlu0 %1128
      %v1131 = vlaneseq
      %v1132 = vshrl.u32 %v1131, 7
      %v1133 = vsub.s32 6, %v1132
      %v1134 = vrot.slane %v855, %v1133
      %v1135 = vmul.f32 %v1129, %v1134
      %v1136 = vadd.f32 %v1022, %v1135
      %1137 = vset.pattern.permute.xlu0 1
      %1138 = vperm.xlu0 %1137, %v1125
      %v1139 = vpop.permute.xlu0 %1138
      %v1141 = vlaneseq
      %v1142 = vshrl.u32 %v1141, 7
      %v1143 = vsub.s32 7, %v1142
      %v1144 = vrot.slane %v855, %v1143
      %v1145 = vmul.f32 %v1139, %v1144
      %v1146 = vadd.f32 %v1136, %v1145
      %1147 = vset.pattern.permute.xlu0 2
      %1148 = vperm.xlu0 %1147, %v1125
      %v1149 = vpop.permute.xlu0 %1148
      %v1151 = vlaneseq
      %v1152 = vshrl.u32 %v1151, 7
      %v1153 = vsub.s32 0, %v1152
      %v1154 = vrot.slane %v856, %v1153
      %v1155 = vmul.f32 %v1149, %v1154
      %v1156 = vadd.f32 %v1146, %v1155
      %v1157 = vmul.f32 %v774, 2.0
      %v1158 = vand.u32 2147483647, %v1157
      %vm1159 = vcmp.le.f32.partialorder %v1158, 0.7853982
      %vm1160 = vcmp.lt.s32.totalorder %v1157, 0
      %v1161 = vand.u32 %v1157, 2139095040
      %v1162 = vshrl.u32 %v1161, 23
      %v1163 = vsub.s32 %v1162, 127
      %v1164 = vand.u32 2147483647, %v1157
      %v1165 = vand.u32 %v1164, 8388607
      %v1166 = vor.u32 %v1165, 8388608
      %v1167 = vsub.s32 0, %v1166
      %v1168 = vadd.s32 %v1163, 1
      %vm1169 = vcmp.gt.s32.totalorder %v1168, 0
      %v1170 = vsel %vm1169, %v1168, 0
      %v1171 = vshrl.u32 %v1170, 5
      %v1172 = vand.u32 %v1170, 31
      %v1173 = vsub.s32 32, %v1172
      %v1174 = vshrl.u32 683565275, %v1173
      %v1175 = vshll.u32 683565275, %v1172
      %v1176 = vshrl.u32 2475754826, %v1173
      %v1177 = vor.u32 %v1175, %v1176
      %v1178 = vshll.u32 2475754826, %v1172
      %v1179 = vshrl.u32 2131351028, %v1173
      %v1180 = vor.u32 %v1178, %v1179
      %v1181 = vshll.u32 2131351028, %v1172
      %v1182 = vshrl.u32 2102212464, %v1173
      %v1183 = vor.u32 %v1181, %v1182
      %v1184 = vshll.u32 2102212464, %v1172
      %v1185 = vshrl.u32 920167782, %v1173
      %v1186 = vor.u32 %v1184, %v1185
      %v1187 = vshll.u32 920167782, %v1172
      %v1188 = vshrl.u32 1326507024, %v1173
      %v1189 = vor.u32 %v1187, %v1188
      %vm1190 = vcmp.lt.s32.totalorder %v1171, 1
      %vm1191 = vcmp.lt.s32.totalorder %v1171, 2
      %vm1192 = vcmp.lt.s32.totalorder %v1171, 3
      %vm1193 = vcmp.lt.s32.totalorder %v1171, 4
      %v1194 = vsel %vm1190, %v1174, %v1177
      %v1195 = vsel %vm1193, %v1183, 2102212464
      %v1196 = vsel %vm1192, %v1180, %v1195
      %v1197 = vsel %vm1191, %v1194, %v1196
      %v1198 = vsel %vm1190, %v1177, %v1180
      %v1199 = vsel %vm1193, %v1186, 920167782
      %v1200 = vsel %vm1192, %v1183, %v1199
      %v1201 = vsel %vm1191, %v1198, %v1200
      %v1202 = vsel %vm1190, %v1180, %v1183
      %v1203 = vsel %vm1193, %v1189, 1326507024
      %v1204 = vsel %vm1192, %v1186, %v1203
      %v1205 = vsel %vm1191, %v1202, %v1204
      %v1206 = vshll.u32 %v1166, 8
      %v1207 = vmul.u32.u64.compose %v1206, %v1205
      %v1208 = vextract.low.u32 %v1207
      %v1209 = vextract.high.u32 %v1207
      %v1210 = vmul.u32.u64.compose %v1206, %v1201
      %v1211 = vextract.low.u32 %v1210
      %v1212 = vextract.high.u32 %v1210
      %v1213 = vmul.u32 %v1206, %v1197
      %v1214 = vadd.s32 %v1209, %v1211
      %vm1215 = vc.u32 %v1209, %v1211
      %v1216 = vadd.s32 %v1212, 1
      %v1217 = vsel %vm1215, %v1216, %v1212
      %v1218 = vadd.s32 %v1213, %v1217
      %v1219 = vadd.s32 %v1218, 536870912
      %v1220 = vshrl.u32 %v1219, 30
      %v1221 = vshll.u32 %v1220, 30
      %v1222 = vsub.s32 %v1218, %v1221
      %vm1223 = vcmp.lt.s32.totalorder %v1222, 0
      %v1224 = vsub.s32 0, %v1222
      %v1225 = vsel %vm1223, %v1224, %v1222
      %v1226 = vclz %v1225
      %v1227 = vsub.s32 %v1226, 2
      %vm1228 = vcmp.gt.s32.totalorder 0, %v1227
      %v1229 = vsel %vm1228, 0, %v1227
      %v1230 = vsub.s32 32, %v1229
      %v1231 = vshll.u32 %v1222, %v1229
      %v1232 = vshrl.u32 %v1214, %v1230
      %v1233 = vor.u32 %v1231, %v1232
      %v1234 = vsub.s32 4294967266, %v1229
      %v1235 = vadd.s32 %v1234, 127
      %v1236 = vshll.u32 %v1235, 23
      %v1237 = vor.u32 4788187, %v1236
      %v1238 = vand.u32 2147483647, %v1237
      %v1240 = vcvt.s32.f32 %v1233
      %v1241 = vmul.f32 %v1240, %v1238
      %v1242 = vxor.u32 %v1241, 2147483648
      %v1243 = vsel %vm1160, %v1242, %v1241
      %v1244 = vsub.s32 4, %v1220
      %v1245 = vsel %vm1160, %v1244, %v1220
      %v1246 = vsel %vm1159, %v1157, %v1243
      %v1247 = vsel %vm1159, 0, %v1245
      %v1248 = vcosq.f32.pop %v1246
      %v1249 = vsinq.f32.pop %v1246
      %vm1250 = vweird.f32 %v1157
      %v1251 = vadd.s32 %v1247, 3
      %v1252 = vand.u32 %v1251, 3
      %vm1253 = vcmp.lt.s32.totalorder %v1252, 2
      %vm1254 = vcmp.eq.s32.totalorder %v1252, 0
      %v1255 = vxor.u32 %v1249, 2147483648
      %v1256 = vsel %vm1254, %v1248, %v1255
      %vm1257 = vcmp.eq.s32.totalorder %v1252, 2
      %v1258 = vxor.u32 %v1248, 2147483648
      %v1259 = vsel %vm1257, %v1258, %v1249
      %v1260 = vsel %vm1253, %v1256, %v1259
      %v1261 = vsel %vm1250, nan, %v1260
      %1263 = vset.pattern.permute.xlu0 0
      %1264 = vperm.xlu0 %1263, %v1261
      %v1265 = vpop.permute.xlu0 %1264
      %v1267 = vlaneseq
      %v1268 = vshrl.u32 %v1267, 7
      %v1269 = vsub.s32 1, %v1268
      %v1270 = vrot.slane %v856, %v1269
      %v1271 = vmul.f32 %v1265, %v1270
      %v1272 = vadd.f32 %v1156, %v1271
      %1273 = vset.pattern.permute.xlu0 1
      %1274 = vperm.xlu0 %1273, %v1261
      %v1275 = vpop.permute.xlu0 %1274
      %v1277 = vlaneseq
      %v1278 = vshrl.u32 %v1277, 7
      %v1279 = vsub.s32 2, %v1278
      %v1280 = vrot.slane %v856, %v1279
      %v1281 = vmul.f32 %v1275, %v1280
      %v1282 = vadd.f32 %v1272, %v1281
      %1283 = vset.pattern.permute.xlu0 2
      %1284 = vperm.xlu0 %1283, %v1261
      %v1285 = vpop.permute.xlu0 %1284
      %v1287 = vlaneseq
      %v1288 = vshrl.u32 %v1287, 7
      %v1289 = vsub.s32 3, %v1288
      %v1290 = vrot.slane %v856, %v1289
      %v1291 = vmul.f32 %v1285, %v1290
      %v1292 = vadd.f32 %v1282, %v1291
      %v1293 = vand.u32 2147483647, %v1157
      %vm1294 = vcmp.le.f32.partialorder %v1293, 0.7853982
      %vm1295 = vcmp.lt.s32.totalorder %v1157, 0
      %v1296 = vand.u32 %v1157, 2139095040
      %v1297 = vshrl.u32 %v1296, 23
      %v1298 = vsub.s32 %v1297, 127
      %v1299 = vand.u32 2147483647, %v1157
      %v1300 = vand.u32 %v1299, 8388607
      %v1301 = vor.u32 %v1300, 8388608
      %v1302 = vsub.s32 0, %v1301
      %v1303 = vadd.s32 %v1298, 1
      %vm1304 = vcmp.gt.s32.totalorder %v1303, 0
      %v1305 = vsel %vm1304, %v1303, 0
      %v1306 = vshrl.u32 %v1305, 5
      %v1307 = vand.u32 %v1305, 31
      %v1308 = vsub.s32 32, %v1307
      %v1309 = vshrl.u32 683565275, %v1308
      %v1310 = vshll.u32 683565275, %v1307
      %v1311 = vshrl.u32 2475754826, %v1308
      %v1312 = vor.u32 %v1310, %v1311
      %v1313 = vshll.u32 2475754826, %v1307
      %v1314 = vshrl.u32 2131351028, %v1308
      %v1315 = vor.u32 %v1313, %v1314
      %v1316 = vshll.u32 2131351028, %v1307
      %v1317 = vshrl.u32 2102212464, %v1308
      %v1318 = vor.u32 %v1316, %v1317
      %v1319 = vshll.u32 2102212464, %v1307
      %v1320 = vshrl.u32 920167782, %v1308
      %v1321 = vor.u32 %v1319, %v1320
      %v1322 = vshll.u32 920167782, %v1307
      %v1323 = vshrl.u32 1326507024, %v1308
      %v1324 = vor.u32 %v1322, %v1323
      %vm1325 = vcmp.lt.s32.totalorder %v1306, 1
      %vm1326 = vcmp.lt.s32.totalorder %v1306, 2
      %vm1327 = vcmp.lt.s32.totalorder %v1306, 3
      %vm1328 = vcmp.lt.s32.totalorder %v1306, 4
      %v1329 = vsel %vm1325, %v1309, %v1312
      %v1330 = vsel %vm1328, %v1318, 2102212464
      %v1331 = vsel %vm1327, %v1315, %v1330
      %v1332 = vsel %vm1326, %v1329, %v1331
      %v1333 = vsel %vm1325, %v1312, %v1315
      %v1334 = vsel %vm1328, %v1321, 920167782
      %v1335 = vsel %vm1327, %v1318, %v1334
      %v1336 = vsel %vm1326, %v1333, %v1335
      %v1337 = vsel %vm1325, %v1315, %v1318
      %v1338 = vsel %vm1328, %v1324, 1326507024
      %v1339 = vsel %vm1327, %v1321, %v1338
      %v1340 = vsel %vm1326, %v1337, %v1339
      %v1341 = vshll.u32 %v1301, 8
      %v1342 = vmul.u32.u64.compose %v1341, %v1340
      %v1343 = vextract.low.u32 %v1342
      %v1344 = vextract.high.u32 %v1342
      %v1345 = vmul.u32.u64.compose %v1341, %v1336
      %v1346 = vextract.low.u32 %v1345
      %v1347 = vextract.high.u32 %v1345
      %v1348 = vmul.u32 %v1341, %v1332
      %v1349 = vadd.s32 %v1344, %v1346
      %vm1350 = vc.u32 %v1344, %v1346
      %v1351 = vadd.s32 %v1347, 1
      %v1352 = vsel %vm1350, %v1351, %v1347
      %v1353 = vadd.s32 %v1348, %v1352
      %v1354 = vadd.s32 %v1353, 536870912
      %v1355 = vshrl.u32 %v1354, 30
      %v1356 = vshll.u32 %v1355, 30
      %v1357 = vsub.s32 %v1353, %v1356
      %vm1358 = vcmp.lt.s32.totalorder %v1357, 0
      %v1359 = vsub.s32 0, %v1357
      %v1360 = vsel %vm1358, %v1359, %v1357
      %v1361 = vclz %v1360
      %v1362 = vsub.s32 %v1361, 2
      %vm1363 = vcmp.gt.s32.totalorder 0, %v1362
      %v1364 = vsel %vm1363, 0, %v1362
      %v1365 = vsub.s32 32, %v1364
      %v1366 = vshll.u32 %v1357, %v1364
      %v1367 = vshrl.u32 %v1349, %v1365
      %v1368 = vor.u32 %v1366, %v1367
      %v1369 = vsub.s32 4294967266, %v1364
      %v1370 = vadd.s32 %v1369, 127
      %v1371 = vshll.u32 %v1370, 23
      %v1372 = vor.u32 4788187, %v1371
      %v1373 = vand.u32 2147483647, %v1372
      %v1375 = vcvt.s32.f32 %v1368
      %v1376 = vmul.f32 %v1375, %v1373
      %v1377 = vxor.u32 %v1376, 2147483648
      %v1378 = vsel %vm1295, %v1377, %v1376
      %v1379 = vsub.s32 4, %v1355
      %v1380 = vsel %vm1295, %v1379, %v1355
      %v1381 = vsel %vm1294, %v1157, %v1378
      %v1382 = vsel %vm1294, 0, %v1380
      %v1383 = vcosq.f32.pop %v1381
      %v1384 = vsinq.f32.pop %v1381
      %vm1385 = vweird.f32 %v1157
      %v1386 = vand.u32 %v1382, 3
      %vm1387 = vcmp.lt.s32.totalorder %v1386, 2
      %vm1388 = vcmp.eq.s32.totalorder %v1386, 0
      %v1389 = vxor.u32 %v1384, 2147483648
      %v1390 = vsel %vm1388, %v1383, %v1389
      %vm1391 = vcmp.eq.s32.totalorder %v1386, 2
      %v1392 = vxor.u32 %v1383, 2147483648
      %v1393 = vsel %vm1391, %v1392, %v1384
      %v1394 = vsel %vm1387, %v1390, %v1393
      %v1395 = vsel %vm1385, nan, %v1394
      %1397 = vset.pattern.permute.xlu0 0
      %1398 = vperm.xlu0 %1397, %v1395
      %v1399 = vpop.permute.xlu0 %1398
      %v1401 = vlaneseq
      %v1402 = vshrl.u32 %v1401, 7
      %v1403 = vsub.s32 4, %v1402
      %v1404 = vrot.slane %v856, %v1403
      %v1405 = vmul.f32 %v1399, %v1404
      %v1406 = vadd.f32 %v1292, %v1405
      %1407 = vset.pattern.permute.xlu0 1
      %1408 = vperm.xlu0 %1407, %v1395
      %v1409 = vpop.permute.xlu0 %1408
      %v1411 = vlaneseq
      %v1412 = vshrl.u32 %v1411, 7
      %v1413 = vsub.s32 5, %v1412
      %v1414 = vrot.slane %v856, %v1413
      %v1415 = vmul.f32 %v1409, %v1414
      %v1416 = vadd.f32 %v1406, %v1415
      %1417 = vset.pattern.permute.xlu0 2
      %1418 = vperm.xlu0 %1417, %v1395
      %v1419 = vpop.permute.xlu0 %1418
      %v1421 = vlaneseq
      %v1422 = vshrl.u32 %v1421, 7
      %v1423 = vsub.s32 6, %v1422
      %v1424 = vrot.slane %v856, %v1423
      %v1425 = vmul.f32 %v1419, %v1424
      %v1426 = vadd.f32 %v1416, %v1425
      %v1427 = vld [vmem:[%s8] sm:$0x1]
      %v1429 = vlaneseq
      %v1430 = vshrl.u32 %v1429, 7
      %v1431 = vsub.s32 0, %v1430
      %v1432 = vrot.slane %v1427, %v1431
      %v1434 = vadd.f32 %v1426, %v1432
      %v1435 = vmax.f32 %v1434, 0.0
      %v1436 = vld [vmem:[%s9] sm:$0xff]
      %v1437 = vld [vmem:[%s9 + $0x8] sm:$0xff]
      %v1438 = vld [vmem:[%s9 + $0x10] sm:$0xff]
      %v1439 = vld [vmem:[%s9 + $0x18] sm:$0xff]
      %v1440 = vld [vmem:[%s10] sm:$0x1]
      %v1442 = vlaneseq
      %v1443 = vshrl.u32 %v1442, 7
      %v1444 = vsub.s32 0, %v1443
      %v1445 = vrot.slane %v1440, %v1444
      %v1448 = vsel %vm701, %v1435, 0
      %1450 = vmatprep.subr.mxu0 0.0
      %1451 = vmatpush1.msra.mxu0 0.0
      %1452 = vmatprep.subr.mxu0 0.0
      %1453 = vmatpush1.msra.mxu0 0.0
      %1454 = vmatprep.subr.mxu0 0.0
      %1455 = vmatpush1.msra.mxu0 0.0
      %1456 = vmatprep.subr.mxu0 0.0
      %1457 = vmatpush1.msra.mxu0 0.0
      %1458 = vmatprep.subr.mxu0 0.0
      %1459 = vmatpush1.msra.mxu0 0.0
      %1460 = vmatprep.subr.mxu0 0.0
      %1461 = vmatpush1.msra.mxu0 0.0
      %1462 = vmatprep.subr.mxu0 0.0
      %1463 = vmatpush1.msra.mxu0 0.0
      %1464 = vmatprep.subr.mxu0 0.0
      %1465 = vmatpush1.msra.mxu0 0.0
      %1466 = vmatprep.subr.mxu0 0.0
      %1467 = vmatpush1.msra.mxu0 0.0
      %1468 = vmatprep.subr.mxu0 0.0
      %1469 = vmatpush1.msra.mxu0 0.0
      %1470 = vmatprep.subr.mxu0 0.0
      %1471 = vmatpush1.msra.mxu0 0.0
      %1472 = vmatprep.subr.mxu0 0.0
      %1473 = vmatpush1.msra.mxu0 0.0
      %1474 = vmatprep.subr.mxu0 0.0
      %1475 = vmatpush1.msra.mxu0 %v1439
      %1476 = vmatprep.subr.mxu0 0.0
      %1477 = vmatpush1.msra.mxu0 %v1438
      %1478 = vmatprep.subr.mxu0 0.0
      %1479 = vmatpush1.msra.mxu0 %v1437
      %1480 = vmatprep.subr.mxu0 0.0
      %1481 = vmatpush1.msra.mxu0 %v1436
      %1482 = vmatprep.subr.mxu0 0.0
      %1483 = vmatpush2.msra.mxu0 0.0
      %1484 = vmatprep.subr.mxu0 0.0
      %1485 = vmatpush2.msra.mxu0 0.0
      %1486 = vmatprep.subr.mxu0 0.0
      %1487 = vmatpush2.msra.mxu0 0.0
      %1488 = vmatprep.subr.mxu0 0.0
      %1489 = vmatpush2.msra.mxu0 0.0
      %1490 = vmatprep.subr.mxu0 0.0
      %1491 = vmatpush2.msra.mxu0 0.0
      %1492 = vmatprep.subr.mxu0 0.0
      %1493 = vmatpush2.msra.mxu0 0.0
      %1494 = vmatprep.subr.mxu0 0.0
      %1495 = vmatpush2.msra.mxu0 0.0
      %1496 = vmatprep.subr.mxu0 0.0
      %1497 = vmatpush2.msra.mxu0 0.0
      %1498 = vmatprep.subr.mxu0 0.0
      %1499 = vmatpush2.msra.mxu0 0.0
      %1500 = vmatprep.subr.mxu0 0.0
      %1501 = vmatpush2.msra.mxu0 0.0
      %1502 = vmatprep.subr.mxu0 0.0
      %1503 = vmatpush2.msra.mxu0 0.0
      %1504 = vmatprep.subr.mxu0 0.0
      %1505 = vmatpush2.msra.mxu0 0.0
      %1506 = vmatprep.subr.mxu0 0.0
      %1507 = vmatpush2.msra.mxu0 0.0
      %1508 = vmatprep.subr.mxu0 0.0
      %1509 = vmatpush2.msra.mxu0 0.0
      %1510 = vmatprep.subr.mxu0 0.0
      %1511 = vmatpush2.msra.mxu0 0.0
      %1512 = vmatprep.subr.mxu0 0.0
      %1513 = vmatpush2.msra.mxu0 0.0
      %1514 = vmatprep.mubr.f32.mxu0 0.0
      %1515 = vmatmul.mubr.f32.gmra.mxu0 %v1448
      %v1516 = vpop.f32.mrf.mxu0
      %v1517 = vadd.f32 %v1445, %v1516
      %v1518 = vpop.f32.mrf.mxu0
      %1519 = vdwg.mxu0
      %v1520 = vmax.f32 %v1517, 0.0
      %v1521 = vld [vmem:[%s11] sm:$0xff]
      %v1522 = vld [vmem:[%s11 + $0x8] sm:$0xff]
      %v1523 = vld [vmem:[%s11 + $0x10] sm:$0xff]
      %v1524 = vld [vmem:[%s11 + $0x18] sm:$0xff]
      %v1525 = vld [vmem:[%s12] sm:$0x1]
      %v1527 = vlaneseq
      %v1528 = vshrl.u32 %v1527, 7
      %v1529 = vsub.s32 0, %v1528
      %v1530 = vrot.slane %v1525, %v1529
      %v1533 = vsel %vm701, %v1520, 0
      %1535 = vmatprep.subr.mxu0 0.0
      %1536 = vmatpush1.msra.mxu0 0.0
      %1537 = vmatprep.subr.mxu0 0.0
      %1538 = vmatpush1.msra.mxu0 0.0
      %1539 = vmatprep.subr.mxu0 0.0
      %1540 = vmatpush1.msra.mxu0 0.0
      %1541 = vmatprep.subr.mxu0 0.0
      %1542 = vmatpush1.msra.mxu0 0.0
      %1543 = vmatprep.subr.mxu0 0.0
      %1544 = vmatpush1.msra.mxu0 0.0
      %1545 = vmatprep.subr.mxu0 0.0
      %1546 = vmatpush1.msra.mxu0 0.0
      %1547 = vmatprep.subr.mxu0 0.0
      %1548 = vmatpush1.msra.mxu0 0.0
      %1549 = vmatprep.subr.mxu0 0.0
      %1550 = vmatpush1.msra.mxu0 0.0
      %1551 = vmatprep.subr.mxu0 0.0
      %1552 = vmatpush1.msra.mxu0 0.0
      %1553 = vmatprep.subr.mxu0 0.0
      %1554 = vmatpush1.msra.mxu0 0.0
      %1555 = vmatprep.subr.mxu0 0.0
      %1556 = vmatpush1.msra.mxu0 0.0
      %1557 = vmatprep.subr.mxu0 0.0
      %1558 = vmatpush1.msra.mxu0 0.0
      %1559 = vmatprep.subr.mxu0 0.0
      %1560 = vmatpush1.msra.mxu0 %v1524
      %1561 = vmatprep.subr.mxu0 0.0
      %1562 = vmatpush1.msra.mxu0 %v1523
      %1563 = vmatprep.subr.mxu0 0.0
      %1564 = vmatpush1.msra.mxu0 %v1522
      %1565 = vmatprep.subr.mxu0 0.0
      %1566 = vmatpush1.msra.mxu0 %v1521
      %1567 = vmatprep.subr.mxu0 0.0
      %1568 = vmatpush2.msra.mxu0 0.0
      %1569 = vmatprep.subr.mxu0 0.0
      %1570 = vmatpush2.msra.mxu0 0.0
      %1571 = vmatprep.subr.mxu0 0.0
      %1572 = vmatpush2.msra.mxu0 0.0
      %1573 = vmatprep.subr.mxu0 0.0
      %1574 = vmatpush2.msra.mxu0 0.0
      %1575 = vmatprep.subr.mxu0 0.0
      %1576 = vmatpush2.msra.mxu0 0.0
      %1577 = vmatprep.subr.mxu0 0.0
      %1578 = vmatpush2.msra.mxu0 0.0
      %1579 = vmatprep.subr.mxu0 0.0
      %1580 = vmatpush2.msra.mxu0 0.0
      %1581 = vmatprep.subr.mxu0 0.0
      %1582 = vmatpush2.msra.mxu0 0.0
      %1583 = vmatprep.subr.mxu0 0.0
      %1584 = vmatpush2.msra.mxu0 0.0
      %1585 = vmatprep.subr.mxu0 0.0
      %1586 = vmatpush2.msra.mxu0 0.0
      %1587 = vmatprep.subr.mxu0 0.0
      %1588 = vmatpush2.msra.mxu0 0.0
      %1589 = vmatprep.subr.mxu0 0.0
      %1590 = vmatpush2.msra.mxu0 0.0
      %1591 = vmatprep.subr.mxu0 0.0
      %1592 = vmatpush2.msra.mxu0 0.0
      %1593 = vmatprep.subr.mxu0 0.0
      %1594 = vmatpush2.msra.mxu0 0.0
      %1595 = vmatprep.subr.mxu0 0.0
      %1596 = vmatpush2.msra.mxu0 0.0
      %1597 = vmatprep.subr.mxu0 0.0
      %1598 = vmatpush2.msra.mxu0 0.0
      %1599 = vmatprep.mubr.f32.mxu0 0.0
      %1600 = vmatmul.mubr.f32.gmra.mxu0 %v1533
      %v1601 = vpop.f32.mrf.mxu0
      %v1602 = vadd.f32 %v1530, %v1601
      %v1603 = vpop.f32.mrf.mxu0
      %1604 = vdwg.mxu0
      %vm1605 = vcmask 64512
      %1606 = vst.msk [vmem:[%s455] sm:$0xff] %vm1605, %v1602
      %p1607 = scmp.lt.s32.totalorder %s24, 1
      %s1608 = scalar_select %p1607, %s24, 1
      %s1609 = smul.addr %s1608, 8
      %s1610 = scalar_lea.vmem %s13, %s1609
      // Predicated region
      $region73: #{tpu_custom_call.1} parent=71 // pred_check
        %p1611 = pneg %p325
      $region74: #{tpu_custom_call.1} parent=71 // pred_check_branch
        %1613 = sbr.rel (%p1611) target = $region76
      $region75: #{tpu_custom_call.1} parent=71 // pred_region
        _
      $region76: #{tpu_custom_call.1} parent=71 // pred_fallthru
        _
    $region72: #{tpu_custom_call.1} parent=5 // pred_fallthru
      _
    %p1614 = scmp.le.s32.totalorder 2, %s19
    // Predicated region
    $region77: #{tpu_custom_call.1} parent=5 // pred_check
      %p1615 = pneg %p1614
    $region78: #{tpu_custom_call.1} parent=5 // pred_check_branch
      %1617 = sbr.rel (%p1615) target = $region80
    $region79: #{tpu_custom_call.1} parent=5 // pred_region
      %s1618 = ssub.s32 %s19, 2
      // Predicated region
      $region81: #{tpu_custom_call.1} parent=79 // pred_check
        %p1619 = pneg %p331
      $region82: #{tpu_custom_call.1} parent=79 // pred_check_branch
        %1621 = sbr.rel (%p1619) target = $region84
      $region83: #{tpu_custom_call.1} parent=79 // pred_region
        %p1622 = scmp.lt.s32.totalorder %s25, 1
        %s1623 = scalar_select %p1622, %s25, 1
        %s1624 = smul.addr %s1623, 8
        %s1625 = scalar_lea.vmem %s13, %s1624
      $region84: #{tpu_custom_call.1} parent=79 // pred_fallthru
        _
    $region80: #{tpu_custom_call.1} parent=5 // pred_fallthru
      _
  $region6: #{tpu_custom_call.1} parent=0 // loop_footer
    %s23 = sadd.s32 1, %s19
  $region7: #{tpu_custom_call.1} parent=0 // loop_footer_branch
    %18 = sbr.rel target = $region3
  $region8: #{tpu_custom_call.1} parent=0 // loop_exit
    _

</llo_original>
